<compile_context>
chip_gen: v5e
topology: v5e:2x2
jax: 0.10.0
libtpu: 0.0.40
codegen_flags: <defaults>
</compile_context>

<pallas_src>
import functools

import jax
import jax.numpy as jnp
from jax.experimental import pallas as pl
from jax.experimental.pallas import tpu as pltpu


MXU_DTYPE = jnp.bfloat16      # matmul operand dtype (accumulation is always f32)


def _round_up(a, b):
    return ((a + b - 1) // b) * b


def _geom(bt, seg, a1, d1, wrow):
    w_out = _round_up(bt * seg, 128)
    w1 = _round_up(w_out + a1 + wrow + 1, 128)
    w_in = _round_up(w1 + d1 + wrow + 1, 128)
    return w_out, w1, w_in


def _vmem_bytes(bt, seg, a1, d1, wrow, cin_pad, cout_pad, mxu_bytes, im2col):
    w_out, w1, w_in = _geom(bt, seg, a1, d1, wrow)
    b = 2 * cin_pad * w_in * 4            # input block (double-buffered by the pipeline)
    b += 2 * cout_pad * w_out * 4         # output block (double-buffered)
    b += 2 * w1 * 4                       # rmask
    b += cin_pad * w_in * mxu_bytes       # low-precision copy of the input
    b += cout_pad * w1 * (4 + mxu_bytes)  # y1 (f32) + low-precision copy
    b += 2 * cout_pad * w_out * 4         # y2 + identity temporaries
    if im2col:
        b += 9 * max(cin_pad, cout_pad) * w1 * mxu_bytes   # im2col patches
    return b


# ---------------------------------------------------------------------------
# Fused Block kernel: conv1 -> BN -> ReLU -> conv2 -> BN -> (+ projection(x))
# B_TILE samples per grid step, everything laid out as (channels, packed_lanes).
# ---------------------------------------------------------------------------
def _block_kernel(x_ref, rmask_ref, w1_ref, w2_ref, *rest,
                  wrow, d1, a1, w1_width, out_width, cin_pad, cout_pad,
                  has_projection, accumulate_taps, mxu_dtype):
    if has_projection:
        wp_ref, bp_ref, sc_ref, sh_ref, out_ref = rest
    else:
        sc_ref, sh_ref, out_ref = rest

    x = x_ref[...]               # (cin_pad, W_in)  f32, zero margins emulate conv padding
    rm = rmask_ref[...]          # (1, W1)          1 inside the real HxW region of frame 1
    sc = sc_ref[...]             # (cout_pad, 1)    BN eval scale = gamma / sqrt(var+eps)
    sh = sh_ref[...]             # (cout_pad, 1)    BN eval shift = beta - mean*scale

    taps = tuple((dh, dw) for dh in (-1, 0, 1) for dw in (-1, 0, 1))

    def conv3x3(src_lo, w_ref, c_pad, tap_base, wout):
        # src_lo: (c_pad, Wsrc) in mxu_dtype with exact zeros outside the valid data
        # (row-gap zeros + halo margins emulate the 3x3 conv's zero padding, so no
        #  column masks are needed).  Output width = wout, one value per lane.
        if accumulate_taps:
            # v7x / large-config path: never materialize the (9*c_pad, wout) patches.
            acc = jnp.zeros((cout_pad, wout), jnp.float32)
            for t, (dh, dw) in enumerate(taps):
                off = tap_base + dh * wrow + dw           # static lane offset
                acc = acc + jnp.dot(w_ref[:, t * c_pad:(t + 1) * c_pad],
                                    src_lo[:, off:off + wout],
                                    preferred_element_type=jnp.float32)
            return acc
        cols = []
        for dh, dw in taps:
            off = tap_base + dh * wrow + dw               # static lane offset
            cols.append(src_lo[:, off:off + wout])
        patches = jnp.concatenate(cols, axis=0)           # (9*c_pad, wout), 8-aligned groups
        return jnp.dot(w_ref[...], patches, preferred_element_type=jnp.float32)

    # conv1 -> BatchNorm (eval) -> ReLU ; halo / row-gap re-zeroed so it acts as
    # conv2's zero padding.
    x_lo = x.astype(mxu_dtype)
    y1 = conv3x3(x_lo, w1_ref, cin_pad, d1, w1_width)     # (cout_pad, W1)
    y1 = jnp.maximum(y1 * sc + sh, 0.0) * rm

    # conv2 -> same (shared) BatchNorm module
    y2 = conv3x3(y1.astype(mxu_dtype), w2_ref, cout_pad, a1, out_width)   # (cout_pad, Wout)
    y2 = y2 * sc + sh

    # shortcut: 1x1 projection conv (with bias) when Cin != Cout, else plain identity
    xc = x[:, a1 + d1:a1 + d1 + out_width]                # 128-aligned identity slice (f32)
    if has_projection:
        ident = jnp.dot(wp_ref[...], xc.astype(mxu_dtype),
                        preferred_element_type=jnp.float32) + bp_ref[...]
    else:
        ident = xc                                        # cin_pad == cout_pad here

    out_ref[...] = y2 + ident                             # lane-dense full-width store


# ---------------------------------------------------------------------------
# Wrapper: layout plumbing (row-gap flatten, batch packing, weight matrices),
# one fused pallas_call gridded over sample groups, NCHW restored at the end.
# ---------------------------------------------------------------------------
@functools.partial(jax.jit, static_argnames=("accumulate_taps",))
def block_forward(x, params, accumulate_taps=None):
    n, cin, h, w = x.shape
    cout = params["w1"].shape[0]
    has_projection = cin != cout

    cin_pad = _round_up(cin, 8)
    cout_pad = _round_up(cout, 8)
    mxu_dtype = MXU_DTYPE
    mxu_bytes = jnp.dtype(mxu_dtype).itemsize

    # Row-gap flattening: row stride wrow = w + 1 leaves one zero lane between rows,
    # so horizontal conv taps never wrap into the neighbouring row's data.
    wrow = w + 1
    L = h * wrow
    a1 = _round_up(max(wrow + 1, 128), 128)   # conv2 center-tap offset (128-aligned)
    d1 = a1                                   # conv1 center-tap offset (128-aligned)
    a_in = a1 + d1                            # identity-slice offset    (128-aligned)
    seg = a1 + L                              # per-sample lane stride shared by all frames

    # ---- pick samples-per-step (B_TILE): amortize per-step overhead, stay in VMEM,
    #      and keep >= 2 grid steps when n >= 2 so v7x's two TCs both get work. ----
    budget = 24 << 20
    max_bt = n if n < 2 else (n + 1) // 2
    bt = 1
    while (bt < max_bt and (bt + 1) * seg <= 32768 and
           _vmem_bytes(bt + 1, seg, a1, d1, wrow, cin_pad, cout_pad, mxu_bytes, True)
           <= budget):
        bt += 1
    n_groups = -(-n // bt)
    n_pad = n_groups * bt

    w_out, w1w, w_in = _geom(bt, seg, a1, d1, wrow)
    if accumulate_taps is None:
        # Avoid materializing the 9x-wide im2col patches when it gets big (v7x: 64 MiB VMEM).
        accumulate_taps = 9 * max(cin_pad, cout_pad) * w1w * mxu_bytes > (8 << 20)
    est = _vmem_bytes(bt, seg, a1, d1, wrow, cin_pad, cout_pad, mxu_bytes,
                      not accumulate_taps)
    vmem_limit = int(min(max(est + est // 2, 16 << 20), 100 << 20))

    # ---- layout plumbing in XLA (lane-dense kernel I/O) ----
    xr = jnp.pad(x.astype(jnp.float32),
                 ((0, n_pad - n), (0, 0), (0, 0), (0, wrow - w)))   # row gap + batch pad
    xr = xr.reshape(n_pad, cin, L)
    xr = jnp.pad(xr, ((0, 0), (0, 0), (0, seg - L)))                # per-sample stride
    xr = xr.reshape(n_groups, bt, cin, seg).transpose(0, 2, 1, 3)
    xr = xr.reshape(n_groups, cin, bt * seg)
    xr = jnp.pad(xr, ((0, 0), (0, cin_pad - cin),
                      (a_in, w_in - a_in - bt * seg)))              # halo + lane round-up

    # region mask for frame 1 (conv1 output / conv2 input): 1 only on real HxW pixels
    p = jnp.arange(w1w, dtype=jnp.int32)
    k = p % seg
    valid = (p < bt * seg) & (k >= a1) & (k < a1 + L) & (((k - a1) % wrow) < w)
    rmask = valid.astype(jnp.float32).reshape(1, w1w)

    # conv weights as (cout_pad, 9*c_pad) matrices, K ordered (kh, kw, ci), tap groups
    # zero-padded to 8 sublanes; cast to the MXU operand dtype.
    def conv_matrix(wt, ci, ci_pad):
        co = wt.shape[0]
        m = jnp.zeros((cout_pad, 3, 3, ci_pad), jnp.float32)
        m = m.at[:co, :, :, :ci].set(wt.transpose(0, 2, 3, 1).astype(jnp.float32))
        return m.reshape(cout_pad, 9 * ci_pad).astype(mxu_dtype)

    w1m = conv_matrix(params["w1"], cin, cin_pad)
    w2m = conv_matrix(params["w2"], cout, cout_pad)

    eps = 1e-5
    sc = params["gamma"] * jax.lax.rsqrt(params["var"].astype(jnp.float32) + eps)
    sh = params["beta"] - params["mean"] * sc
    sc_p = jnp.zeros((cout_pad,), jnp.float32).at[:cout].set(sc).reshape(cout_pad, 1)
    sh_p = jnp.zeros((cout_pad,), jnp.float32).at[:cout].set(sh).reshape(cout_pad, 1)

    in_arrays = [xr, rmask, w1m, w2m]
    in_specs = [
        pl.BlockSpec((None, cin_pad, w_in), lambda i: (i, 0, 0)),       # packed input
        pl.BlockSpec((1, w1w), lambda i: (0, 0)),                       # region mask
        pl.BlockSpec((cout_pad, 9 * cin_pad), lambda i: (0, 0)),        # conv1 weights
        pl.BlockSpec((cout_pad, 9 * cout_pad), lambda i: (0, 0)),       # conv2 weights
    ]
    if has_projection:
        wp = jnp.zeros((cout_pad, cin_pad), jnp.float32).at[:cout, :cin].set(
            params["proj_w"].reshape(cout, cin)).astype(mxu_dtype)
        bp = jnp.zeros((cout_pad, 1), jnp.float32).at[:cout, 0].set(params["proj_b"])
        in_arrays += [wp, bp]
        in_specs += [pl.BlockSpec((cout_pad, cin_pad), lambda i: (0, 0)),
                     pl.BlockSpec((cout_pad, 1), lambda i: (0, 0))]
    in_arrays += [sc_p, sh_p]
    in_specs += [pl.BlockSpec((cout_pad, 1), lambda i: (0, 0)),
                 pl.BlockSpec((cout_pad, 1), lambda i: (0, 0))]

    flops = 2 * n * h * w * 9 * (cin * cout + cout * cout)
    if has_projection:
        flops += 2 * n * h * w * cin * cout
    bytes_accessed = int((x.size + n * cout * h * w) * 4
                         + (w1m.size + w2m.size) * mxu_bytes)
    cost = pl.CostEstimate(flops=flops, transcendentals=0, bytes_accessed=bytes_accessed)

    kernel = functools.partial(
        _block_kernel, wrow=wrow, d1=d1, a1=a1, w1_width=w1w, out_width=w_out,
        cin_pad=cin_pad, cout_pad=cout_pad, has_projection=has_projection,
        accumulate_taps=bool(accumulate_taps), mxu_dtype=mxu_dtype)

    out = pl.pallas_call(
        kernel,
        out_shape=jax.ShapeDtypeStruct((n_groups, cout_pad, w_out), jnp.float32),
        grid=(n_groups,),                                # one sample group per step
        in_specs=in_specs,
        out_specs=pl.BlockSpec((None, cout_pad, w_out), lambda i: (i, 0, 0)),
        compiler_params=pltpu.CompilerParams(
            dimension_semantics=("parallel",),           # shard groups across v7x's 2 TCs
            vmem_limit_bytes=vmem_limit),
        cost_estimate=cost,
    )(*in_arrays)

    # ---- restore NCHW (layout plumbing) ----
    out = out[:, :cout, :bt * seg]
    out = out.reshape(n_groups, cout, bt, seg).transpose(0, 2, 1, 3)
    out = out.reshape(n_pad, cout, seg)[:n, :, :L]
    out = out.reshape(n, cout, h, wrow)[:, :, :, :w]
    return out


# ---------------------------------------------------------------------------
# Pure-JAX reference (eval-mode Block.forward) for the correctness check.
# ---------------------------------------------------------------------------
def block_reference(x, params):
    n, cin, h, w = x.shape
    cout = params["w1"].shape[0]
    eps = 1e-5
    dn = ("NCHW", "OIHW", "NCHW")
    hp = jax.lax.Precision.HIGHEST

    def conv(z, wt, pad):
        return jax.lax.conv_general_dilated(z, wt, (1, 1), ((pad, pad), (pad, pad)),
                                            dimension_numbers=dn, precision=hp)

    sc = params["gamma"] * jax.lax.rsqrt(params["var"] + eps)
    sh = params["beta"] - params["mean"] * sc

    def bn(z):
        return z * sc[None, :, None, None] + sh[None, :, None, None]

    y = jax.nn.relu(bn(conv(x, params["w1"], 1)))
    y = bn(conv(y, params["w2"], 1))
    if cin != cout:
        ident = conv(x, params["proj_w"], 0) + params["proj_b"][None, :, None, None]
    else:
        ident = x
    return y + ident


if __name__ == "__main__":
    key = jax.random.PRNGKey(0)

    def make_params(k, cin, cout):
        ks = jax.random.split(k, 8)
        pr = {
            "w1": 0.2 * jax.random.normal(ks[0], (cout, cin, 3, 3), jnp.float32),
            "w2": 0.2 * jax.random.normal(ks[1], (cout, cout, 3, 3), jnp.float32),
            "gamma": 1.0 + 0.1 * jax.random.normal(ks[2], (cout,), jnp.float32),
            "beta": 0.1 * jax.random.normal(ks[3], (cout,), jnp.float32),
            "mean": 0.1 * jax.random.normal(ks[4], (cout,), jnp.float32),
            "var": 1.0 + 0.1 * jnp.abs(jax.random.normal(ks[5], (cout,), jnp.float32)),
        }
        if cin != cout:
            pr["proj_w"] = 0.2 * jax.random.normal(ks[6], (cout, cin, 1, 1), jnp.float32)
            pr["proj_b"] = 0.1 * jax.random.normal(ks[7], (cout,), jnp.float32)
        return pr

    # bf16 MXU operands (f32 accumulation) through two chained 3x3 convs -> loosen the
    # tolerance accordingly; MXU_DTYPE = jnp.float32 would pass at 1e-3.
    tol = 1e-3 if MXU_DTYPE == jnp.float32 else 1e-1

    k1, k2, k3, k4 = jax.random.split(key, 4)

    # Config A: projected shortcut (cin != cout); exercises batch packing (2 samples/step,
    # 2 grid steps) and the im2col path.
    xA = jax.random.normal(k1, (4, 4, 16, 16), jnp.float32)
    pA = make_params(k2, 4, 8)
    outA = jax.block_until_ready(block_forward(xA, pA))
    refA = jax.block_until_ready(block_reference(xA, pA))
    assert outA.shape == refA.shape, (outA.shape, refA.shape)
    assert bool(jnp.all(jnp.isfinite(outA)))
    errA = float(jnp.max(jnp.abs(outA - refA)))
    assert errA < tol, f"config A max abs err {errA}"

    # Config B: identity shortcut (cin == cout), odd batch (batch-padding path),
    # H*W not a multiple of 128, and the sum-of-taps (no-im2col) conv path.
    xB = jax.random.normal(k3, (3, 8, 12, 12), jnp.float32)
    pB = make_params(k4, 8, 8)
    outB = jax.block_until_ready(block_forward(xB, pB, accumulate_taps=True))
    refB = jax.block_until_ready(block_reference(xB, pB))
    assert outB.shape == refB.shape, (outB.shape, refB.shape)
    assert bool(jnp.all(jnp.isfinite(outB)))
    errB = float(jnp.max(jnp.abs(outB - refB)))
    assert errB < tol, f"config B max abs err {errB}"

    print("KERNEL_OK")
</pallas_src>

<mosaic_0001>
module attributes {stable_mosaic.version = 11 : i64} {
  func.func @_block_kernel(%arg0: i32, %arg1: memref<1x8x1408xf32, #tpu.memory_space<vmem>>, %arg2: memref<1x1152xf32, #tpu.memory_space<vmem>>, %arg3: memref<8x72xbf16, #tpu.memory_space<vmem>>, %arg4: memref<8x72xbf16, #tpu.memory_space<vmem>>, %arg5: memref<8x8xbf16, #tpu.memory_space<vmem>>, %arg6: memref<8x1xf32, #tpu.memory_space<vmem>>, %arg7: memref<8x1xf32, #tpu.memory_space<vmem>>, %arg8: memref<8x1xf32, #tpu.memory_space<vmem>>, %arg9: memref<1x8x896xf32, #tpu.memory_space<vmem>>) attributes {dimension_semantics = [#tpu.dimension_semantics<parallel>], iteration_bounds = array<i64: 2>, scalar_prefetch = 0 : i64, scratch_operands = 0 : i64, tpu.core_type = #tpu.core_type<tc>, window_params = [{transform_indices = @transform_0, window_bounds = array<i64: 1, 8, 1408>}, {pipeline_mode = #tpu.pipeline_mode<synchronous>, transform_indices = @transform_1, window_bounds = array<i64: 1, 1152>}, {pipeline_mode = #tpu.pipeline_mode<synchronous>, transform_indices = @transform_2, window_bounds = array<i64: 8, 72>}, {pipeline_mode = #tpu.pipeline_mode<synchronous>, transform_indices = @transform_3, window_bounds = array<i64: 8, 72>}, {pipeline_mode = #tpu.pipeline_mode<synchronous>, transform_indices = @transform_4, window_bounds = array<i64: 8, 8>}, {pipeline_mode = #tpu.pipeline_mode<synchronous>, transform_indices = @transform_5, window_bounds = array<i64: 8, 1>}, {pipeline_mode = #tpu.pipeline_mode<synchronous>, transform_indices = @transform_6, window_bounds = array<i64: 8, 1>}, {pipeline_mode = #tpu.pipeline_mode<synchronous>, transform_indices = @transform_7, window_bounds = array<i64: 8, 1>}, {transform_indices = @transform_8, window_bounds = array<i64: 1, 8, 896>}]} {
    %c0 = arith.constant 0 : index
    %c0_0 = arith.constant 0 : index
    %c0_1 = arith.constant 0 : index
    %0 = vector.load %arg1[%c0, %c0_0, %c0_1] : memref<1x8x1408xf32, #tpu.memory_space<vmem>>, vector<1x8x1408xf32>
    %1 = vector.shape_cast %0 : vector<1x8x1408xf32> to vector<8x1408xf32>
    %c0_2 = arith.constant 0 : index
    %c0_3 = arith.constant 0 : index
    %2 = vector.load %arg2[%c0_2, %c0_3] : memref<1x1152xf32, #tpu.memory_space<vmem>>, vector<1x1152xf32>
    %c0_4 = arith.constant 0 : index
    %c0_5 = arith.constant 0 : index
    %3 = vector.load %arg7[%c0_4, %c0_5] : memref<8x1xf32, #tpu.memory_space<vmem>>, vector<8x1xf32>
    %c0_6 = arith.constant 0 : index
    %c0_7 = arith.constant 0 : index
    %4 = vector.load %arg8[%c0_6, %c0_7] : memref<8x1xf32, #tpu.memory_space<vmem>>, vector<8x1xf32>
    %5 = arith.truncf %1 : vector<8x1408xf32> to vector<8x1408xbf16>
    %6 = vector.extract_strided_slice %5 {offsets = [0, 110], sizes = [8, 1152], strides = [1, 1]} : vector<8x1408xbf16> to vector<8x1152xbf16>
    %7 = vector.extract_strided_slice %5 {offsets = [0, 111], sizes = [8, 1152], strides = [1, 1]} : vector<8x1408xbf16> to vector<8x1152xbf16>
    %8 = vector.extract_strided_slice %5 {offsets = [0, 112], sizes = [8, 1152], strides = [1, 1]} : vector<8x1408xbf16> to vector<8x1152xbf16>
    %9 = vector.extract_strided_slice %5 {offsets = [0, 127], sizes = [8, 1152], strides = [1, 1]} : vector<8x1408xbf16> to vector<8x1152xbf16>
    %10 = vector.extract_strided_slice %5 {offsets = [0, 128], sizes = [8, 1152], strides = [1, 1]} : vector<8x1408xbf16> to vector<8x1152xbf16>
    %11 = vector.extract_strided_slice %5 {offsets = [0, 129], sizes = [8, 1152], strides = [1, 1]} : vector<8x1408xbf16> to vector<8x1152xbf16>
    %12 = vector.extract_strided_slice %5 {offsets = [0, 144], sizes = [8, 1152], strides = [1, 1]} : vector<8x1408xbf16> to vector<8x1152xbf16>
    %13 = vector.extract_strided_slice %5 {offsets = [0, 145], sizes = [8, 1152], strides = [1, 1]} : vector<8x1408xbf16> to vector<8x1152xbf16>
    %14 = vector.extract_strided_slice %5 {offsets = [0, 146], sizes = [8, 1152], strides = [1, 1]} : vector<8x1408xbf16> to vector<8x1152xbf16>
    %15 = tpu.concatenate %6, %7, %8, %9, %10, %11, %12, %13, %14 in 0 : vector<8x1152xbf16>, vector<8x1152xbf16>, vector<8x1152xbf16>, vector<8x1152xbf16>, vector<8x1152xbf16>, vector<8x1152xbf16>, vector<8x1152xbf16>, vector<8x1152xbf16>, vector<8x1152xbf16> -> vector<72x1152xbf16>
    %c0_8 = arith.constant 0 : index
    %c0_9 = arith.constant 0 : index
    %16 = vector.load %arg3[%c0_8, %c0_9] : memref<8x72xbf16, #tpu.memory_space<vmem>>, vector<8x72xbf16>
    %cst = arith.constant dense<0.000000e+00> : vector<8x1152xf32>
    %17 = tpu.matmul %16, %15, %cst {dimension_numbers = #tpu.dot_dimension_numbers<[1], [0], [0], [1], [0, 0, 1, 1], [], []>} : vector<8x72xbf16>, vector<72x1152xbf16>, vector<8x1152xf32> -> vector<8x1152xf32>
    %18 = vector.broadcast %3 : vector<8x1xf32> to vector<8x1152xf32>
    %19 = arith.mulf %17, %18 : vector<8x1152xf32>
    %20 = vector.broadcast %4 : vector<8x1xf32> to vector<8x1152xf32>
    %21 = arith.addf %19, %20 : vector<8x1152xf32>
    %cst_10 = arith.constant 0.000000e+00 : f32
    %22 = vector.broadcast %cst_10 : f32 to vector<8x1152xf32>
    %23 = arith.maximumf %21, %22 : vector<8x1152xf32>
    %24 = vector.broadcast %2 : vector<1x1152xf32> to vector<8x1152xf32>
    %25 = arith.mulf %23, %24 : vector<8x1152xf32>
    %26 = arith.truncf %25 : vector<8x1152xf32> to vector<8x1152xbf16>
    %27 = vector.extract_strided_slice %26 {offsets = [0, 110], sizes = [8, 896], strides = [1, 1]} : vector<8x1152xbf16> to vector<8x896xbf16>
    %28 = vector.extract_strided_slice %26 {offsets = [0, 111], sizes = [8, 896], strides = [1, 1]} : vector<8x1152xbf16> to vector<8x896xbf16>
    %29 = vector.extract_strided_slice %26 {offsets = [0, 112], sizes = [8, 896], strides = [1, 1]} : vector<8x1152xbf16> to vector<8x896xbf16>
    %30 = vector.extract_strided_slice %26 {offsets = [0, 127], sizes = [8, 896], strides = [1, 1]} : vector<8x1152xbf16> to vector<8x896xbf16>
    %31 = vector.extract_strided_slice %26 {offsets = [0, 128], sizes = [8, 896], strides = [1, 1]} : vector<8x1152xbf16> to vector<8x896xbf16>
    %32 = vector.extract_strided_slice %26 {offsets = [0, 129], sizes = [8, 896], strides = [1, 1]} : vector<8x1152xbf16> to vector<8x896xbf16>
    %33 = vector.extract_strided_slice %26 {offsets = [0, 144], sizes = [8, 896], strides = [1, 1]} : vector<8x1152xbf16> to vector<8x896xbf16>
    %34 = vector.extract_strided_slice %26 {offsets = [0, 145], sizes = [8, 896], strides = [1, 1]} : vector<8x1152xbf16> to vector<8x896xbf16>
    %35 = vector.extract_strided_slice %26 {offsets = [0, 146], sizes = [8, 896], strides = [1, 1]} : vector<8x1152xbf16> to vector<8x896xbf16>
    %36 = tpu.concatenate %27, %28, %29, %30, %31, %32, %33, %34, %35 in 0 : vector<8x896xbf16>, vector<8x896xbf16>, vector<8x896xbf16>, vector<8x896xbf16>, vector<8x896xbf16>, vector<8x896xbf16>, vector<8x896xbf16>, vector<8x896xbf16>, vector<8x896xbf16> -> vector<72x896xbf16>
    %c0_11 = arith.constant 0 : index
    %c0_12 = arith.constant 0 : index
    %37 = vector.load %arg4[%c0_11, %c0_12] : memref<8x72xbf16, #tpu.memory_space<vmem>>, vector<8x72xbf16>
    %cst_13 = arith.constant dense<0.000000e+00> : vector<8x896xf32>
    %38 = tpu.matmul %37, %36, %cst_13 {dimension_numbers = #tpu.dot_dimension_numbers<[1], [0], [0], [1], [0, 0, 1, 1], [], []>} : vector<8x72xbf16>, vector<72x896xbf16>, vector<8x896xf32> -> vector<8x896xf32>
    %39 = vector.broadcast %3 : vector<8x1xf32> to vector<8x896xf32>
    %40 = arith.mulf %38, %39 : vector<8x896xf32>
    %41 = vector.broadcast %4 : vector<8x1xf32> to vector<8x896xf32>
    %42 = arith.addf %40, %41 : vector<8x896xf32>
    %43 = vector.extract_strided_slice %1 {offsets = [0, 256], sizes = [8, 896], strides = [1, 1]} : vector<8x1408xf32> to vector<8x896xf32>
    %c0_14 = arith.constant 0 : index
    %c0_15 = arith.constant 0 : index
    %44 = vector.load %arg5[%c0_14, %c0_15] : memref<8x8xbf16, #tpu.memory_space<vmem>>, vector<8x8xbf16>
    %45 = arith.truncf %43 : vector<8x896xf32> to vector<8x896xbf16>
    %cst_16 = arith.constant dense<0.000000e+00> : vector<8x896xf32>
    %46 = tpu.matmul %44, %45, %cst_16 {dimension_numbers = #tpu.dot_dimension_numbers<[1], [0], [0], [1], [0, 0, 1, 1], [], []>} : vector<8x8xbf16>, vector<8x896xbf16>, vector<8x896xf32> -> vector<8x896xf32>
    %c0_17 = arith.constant 0 : index
    %c0_18 = arith.constant 0 : index
    %47 = vector.load %arg6[%c0_17, %c0_18] : memref<8x1xf32, #tpu.memory_space<vmem>>, vector<8x1xf32>
    %48 = vector.broadcast %47 : vector<8x1xf32> to vector<8x896xf32>
    %49 = arith.addf %46, %48 : vector<8x896xf32>
    %50 = arith.addf %42, %49 : vector<8x896xf32>
    %c0_19 = arith.constant 0 : index
    %c0_20 = arith.constant 0 : index
    %c0_21 = arith.constant 0 : index
    %51 = vector.load %arg9[%c0_19, %c0_20, %c0_21] : memref<1x8x896xf32, #tpu.memory_space<vmem>>, vector<1x8x896xf32>
    %52 = vector.shape_cast %51 : vector<1x8x896xf32> to vector<8x896xf32>
    %53 = vector.shape_cast %50 : vector<8x896xf32> to vector<1x8x896xf32>
    tpu.vector_store %arg9[%c0_19, %c0_20, %c0_21], %53 {strides = array<i32>} : memref<1x8x896xf32, #tpu.memory_space<vmem>>, vector<1x8x896xf32>,
    return
  }
  func.func @transform_0(%arg0: i32) -> (i32, i32, i32) {
    %c0_i32 = arith.constant 0 : i32
    %c0_i32_0 = arith.constant 0 : i32
    %c0_i32_1 = arith.constant 0 : i32
    return %arg0, %c0_i32, %c0_i32_0 : i32, i32, i32
  }
  func.func @transform_1(%arg0: i32) -> (i32, i32) {
    %c0_i32 = arith.constant 0 : i32
    %c0_i32_0 = arith.constant 0 : i32
    %c0_i32_1 = arith.constant 0 : i32
    return %c0_i32, %c0_i32_0 : i32, i32
  }
  func.func @transform_2(%arg0: i32) -> (i32, i32) {
    %c0_i32 = arith.constant 0 : i32
    %c0_i32_0 = arith.constant 0 : i32
    %c0_i32_1 = arith.constant 0 : i32
    return %c0_i32, %c0_i32_0 : i32, i32
  }
  func.func @transform_3(%arg0: i32) -> (i32, i32) {
    %c0_i32 = arith.constant 0 : i32
    %c0_i32_0 = arith.constant 0 : i32
    %c0_i32_1 = arith.constant 0 : i32
    return %c0_i32, %c0_i32_0 : i32, i32
  }
  func.func @transform_4(%arg0: i32) -> (i32, i32) {
    %c0_i32 = arith.constant 0 : i32
    %c0_i32_0 = arith.constant 0 : i32
    %c0_i32_1 = arith.constant 0 : i32
    return %c0_i32, %c0_i32_0 : i32, i32
  }
  func.func @transform_5(%arg0: i32) -> (i32, i32) {
    %c0_i32 = arith.constant 0 : i32
    %c0_i32_0 = arith.constant 0 : i32
    %c0_i32_1 = arith.constant 0 : i32
    return %c0_i32, %c0_i32_0 : i32, i32
  }
  func.func @transform_6(%arg0: i32) -> (i32, i32) {
    %c0_i32 = arith.constant 0 : i32
    %c0_i32_0 = arith.constant 0 : i32
    %c0_i32_1 = arith.constant 0 : i32
    return %c0_i32, %c0_i32_0 : i32, i32
  }
  func.func @transform_7(%arg0: i32) -> (i32, i32) {
    %c0_i32 = arith.constant 0 : i32
    %c0_i32_0 = arith.constant 0 : i32
    %c0_i32_1 = arith.constant 0 : i32
    return %c0_i32, %c0_i32_0 : i32, i32
  }
  func.func @transform_8(%arg0: i32) -> (i32, i32, i32) {
    %c0_i32 = arith.constant 0 : i32
    %c0_i32_0 = arith.constant 0 : i32
    %c0_i32_1 = arith.constant 0 : i32
    return %arg0, %c0_i32, %c0_i32_0 : i32, i32, i32
  }
}

</mosaic_0001>

<llo_original>
// kernel: block_forward.1
$region0: #{block_forward.1}
  #allocation0 [shape = 'u32[]', space=smem, size = 0x4, offset = 0x4, fixed_abs, tag = 'smem constant byte address 0x4 - core index']
  #allocation1 [shape = 'u32[72,128]{1,0:T(1,128)}', space=vmem, size = 0x9000, scoped, tag = 'internal scratch']
  %s0 = inlined_call_operand.vmem [shape: f32[2,8,1408], index: 0, kind: input, shape index: {}]
  %s1 = inlined_call_operand.vmem [shape: f32[1,1152], index: 1, kind: input, shape index: {}]
  %s2 = inlined_call_operand.vmem [shape: bf16[8,72], index: 2, kind: input, shape index: {}]
  %s3 = inlined_call_operand.vmem [shape: bf16[8,72], index: 3, kind: input, shape index: {}]
  %s4 = inlined_call_operand.vmem [shape: bf16[8,8], index: 4, kind: input, shape index: {}]
  %s5 = inlined_call_operand.vmem [shape: f32[8,1], index: 5, kind: input, shape index: {}]
  %s6 = inlined_call_operand.vmem [shape: f32[8,1], index: 6, kind: input, shape index: {}]
  %s7 = inlined_call_operand.vmem [shape: f32[8,1], index: 7, kind: input, shape index: {}]
  %s8 = inlined_call_operand.vmem [shape: f32[2,8,896], index: 8, kind: output, shape index: {}]
  %s9 = sld [smem:[#allocation0]]
  $region65: #{block_forward.1} parent=0
    _
  %s11 = ssub.s32 1, %s9
  %s12 = scalar_select 0, %s11, %s9
  loop: start=0, step=1, limit=4
  $region2: #{block_forward.1} parent=0 // loop_pre_header
    _
  $region3: #{block_forward.1} parent=0 // loop_header
    %s14 = sphi 0, %s18
    %p15 = scmp.ge.s32.totalorder %s14, 4
    %s24 = sphi 0, %s26
    %s27 = sphi 0, %s24
    %s28 = sphi 0, %s27
    %s44 = sphi 0, %s28
    %s48 = sphi 0, %s48
    %s50 = sphi 0, %s48
    %s51 = sphi 0, %s50
    %s65 = sphi 0, %s51
    %s69 = sphi 0, %s69
    %s71 = sphi 0, %s69
    %s72 = sphi 0, %s71
    %s86 = sphi 0, %s72
    %s90 = sphi 0, %s90
    %s92 = sphi 0, %s90
    %s93 = sphi 0, %s92
    %s107 = sphi 0, %s93
    %s111 = sphi 0, %s111
    %s113 = sphi 0, %s111
    %s114 = sphi 0, %s113
    %s128 = sphi 0, %s114
    %s132 = sphi 0, %s132
    %s134 = sphi 0, %s132
    %s135 = sphi 0, %s134
    %s149 = sphi 0, %s135
    %s153 = sphi 0, %s153
    %s155 = sphi 0, %s153
    %s156 = sphi 0, %s155
    %s170 = sphi 0, %s156
    %s174 = sphi 0, %s174
    %s176 = sphi 0, %s174
    %s177 = sphi 0, %s176
    %s191 = sphi 0, %s177
    %s197 = sphi 0, %s199
    %s200 = sphi 0, %s197
    %s201 = sphi 0, %s200
    %s217 = sphi 0, %s201
  $region4: #{block_forward.1} parent=0 // loop_header_branch
    %17 = sbr.rel (%p15) target = $region8
  $region5: #{block_forward.1} parent=0 // loop_body
    %s19 = ssub.s32 %s14, 1
    %s20 = ssub.s32 %s14, 2
    %s21 = sadd.s32 %s14, 1
    %s22 = ssub.s32 %s14, %s21
    %p23 = scmp.eq.s32.totalorder %s22, 0
    %s25 = sadd.s32 %s24, 1
    %s26 = scalar_select %p23, %s24, %s25
    %p29 = pneg %p23
    %p30 = scmp.eq.s32.totalorder %s14, 1
    %p31 = por %p29, %p30
    %p32 = scmp.ne.s32.totalorder %s24, %s27
    %p33 = scmp.eq.s32.totalorder %s14, 0
    %p34 = por %p32, %p33
    %p35 = scmp.ne.s32.totalorder %s24, %s27
    %p36 = scmp.eq.s32.totalorder %s19, 1
    %p37 = por %p35, %p36
    %p38 = scmp.ne.s32.totalorder %s27, %s28
    %p39 = scmp.eq.s32.totalorder %s19, 0
    %p40 = por %p38, %p39
    %p41 = scmp.ne.s32.totalorder %s27, %s28
    %p42 = scmp.eq.s32.totalorder %s20, 1
    %p43 = por %p41, %p42
    %p45 = scmp.ne.s32.totalorder %s28, %s44
    %p46 = scmp.eq.s32.totalorder %s20, 0
    %p47 = por %p45, %p46
    %s49 = sadd.s32 %s48, 1
    %p52 = scmp.eq.s32.totalorder %s14, 1
    %p53 = scmp.ne.s32.totalorder %s48, %s50
    %p54 = scmp.eq.s32.totalorder %s14, 0
    %p55 = por %p53, %p54
    %p56 = scmp.ne.s32.totalorder %s48, %s50
    %p57 = scmp.eq.s32.totalorder %s19, 1
    %p58 = por %p56, %p57
    %p59 = scmp.ne.s32.totalorder %s50, %s51
    %p60 = scmp.eq.s32.totalorder %s19, 0
    %p61 = por %p59, %p60
    %p62 = scmp.ne.s32.totalorder %s50, %s51
    %p63 = scmp.eq.s32.totalorder %s20, 1
    %p64 = por %p62, %p63
    %p66 = scmp.ne.s32.totalorder %s51, %s65
    %p67 = scmp.eq.s32.totalorder %s20, 0
    %p68 = por %p66, %p67
    %s70 = sadd.s32 %s69, 1
    %p73 = scmp.eq.s32.totalorder %s14, 1
    %p74 = scmp.ne.s32.totalorder %s69, %s71
    %p75 = scmp.eq.s32.totalorder %s14, 0
    %p76 = por %p74, %p75
    %p77 = scmp.ne.s32.totalorder %s69, %s71
    %p78 = scmp.eq.s32.totalorder %s19, 1
    %p79 = por %p77, %p78
    %p80 = scmp.ne.s32.totalorder %s71, %s72
    %p81 = scmp.eq.s32.totalorder %s19, 0
    %p82 = por %p80, %p81
    %p83 = scmp.ne.s32.totalorder %s71, %s72
    %p84 = scmp.eq.s32.totalorder %s20, 1
    %p85 = por %p83, %p84
    %p87 = scmp.ne.s32.totalorder %s72, %s86
    %p88 = scmp.eq.s32.totalorder %s20, 0
    %p89 = por %p87, %p88
    %s91 = sadd.s32 %s90, 1
    %p94 = scmp.eq.s32.totalorder %s14, 1
    %p95 = scmp.ne.s32.totalorder %s90, %s92
    %p96 = scmp.eq.s32.totalorder %s14, 0
    %p97 = por %p95, %p96
    %p98 = scmp.ne.s32.totalorder %s90, %s92
    %p99 = scmp.eq.s32.totalorder %s19, 1
    %p100 = por %p98, %p99
    %p101 = scmp.ne.s32.totalorder %s92, %s93
    %p102 = scmp.eq.s32.totalorder %s19, 0
    %p103 = por %p101, %p102
    %p104 = scmp.ne.s32.totalorder %s92, %s93
    %p105 = scmp.eq.s32.totalorder %s20, 1
    %p106 = por %p104, %p105
    %p108 = scmp.ne.s32.totalorder %s93, %s107
    %p109 = scmp.eq.s32.totalorder %s20, 0
    %p110 = por %p108, %p109
    %s112 = sadd.s32 %s111, 1
    %p115 = scmp.eq.s32.totalorder %s14, 1
    %p116 = scmp.ne.s32.totalorder %s111, %s113
    %p117 = scmp.eq.s32.totalorder %s14, 0
    %p118 = por %p116, %p117
    %p119 = scmp.ne.s32.totalorder %s111, %s113
    %p120 = scmp.eq.s32.totalorder %s19, 1
    %p121 = por %p119, %p120
    %p122 = scmp.ne.s32.totalorder %s113, %s114
    %p123 = scmp.eq.s32.totalorder %s19, 0
    %p124 = por %p122, %p123
    %p125 = scmp.ne.s32.totalorder %s113, %s114
    %p126 = scmp.eq.s32.totalorder %s20, 1
    %p127 = por %p125, %p126
    %p129 = scmp.ne.s32.totalorder %s114, %s128
    %p130 = scmp.eq.s32.totalorder %s20, 0
    %p131 = por %p129, %p130
    %s133 = sadd.s32 %s132, 1
    %p136 = scmp.eq.s32.totalorder %s14, 1
    %p137 = scmp.ne.s32.totalorder %s132, %s134
    %p138 = scmp.eq.s32.totalorder %s14, 0
    %p139 = por %p137, %p138
    %p140 = scmp.ne.s32.totalorder %s132, %s134
    %p141 = scmp.eq.s32.totalorder %s19, 1
    %p142 = por %p140, %p141
    %p143 = scmp.ne.s32.totalorder %s134, %s135
    %p144 = scmp.eq.s32.totalorder %s19, 0
    %p145 = por %p143, %p144
    %p146 = scmp.ne.s32.totalorder %s134, %s135
    %p147 = scmp.eq.s32.totalorder %s20, 1
    %p148 = por %p146, %p147
    %p150 = scmp.ne.s32.totalorder %s135, %s149
    %p151 = scmp.eq.s32.totalorder %s20, 0
    %p152 = por %p150, %p151
    %s154 = sadd.s32 %s153, 1
    %p157 = scmp.eq.s32.totalorder %s14, 1
    %p158 = scmp.ne.s32.totalorder %s153, %s155
    %p159 = scmp.eq.s32.totalorder %s14, 0
    %p160 = por %p158, %p159
    %p161 = scmp.ne.s32.totalorder %s153, %s155
    %p162 = scmp.eq.s32.totalorder %s19, 1
    %p163 = por %p161, %p162
    %p164 = scmp.ne.s32.totalorder %s155, %s156
    %p165 = scmp.eq.s32.totalorder %s19, 0
    %p166 = por %p164, %p165
    %p167 = scmp.ne.s32.totalorder %s155, %s156
    %p168 = scmp.eq.s32.totalorder %s20, 1
    %p169 = por %p167, %p168
    %p171 = scmp.ne.s32.totalorder %s156, %s170
    %p172 = scmp.eq.s32.totalorder %s20, 0
    %p173 = por %p171, %p172
    %s175 = sadd.s32 %s174, 1
    %p178 = scmp.eq.s32.totalorder %s14, 1
    %p179 = scmp.ne.s32.totalorder %s174, %s176
    %p180 = scmp.eq.s32.totalorder %s14, 0
    %p181 = por %p179, %p180
    %p182 = scmp.ne.s32.totalorder %s174, %s176
    %p183 = scmp.eq.s32.totalorder %s19, 1
    %p184 = por %p182, %p183
    %p185 = scmp.ne.s32.totalorder %s176, %s177
    %p186 = scmp.eq.s32.totalorder %s19, 0
    %p187 = por %p185, %p186
    %p188 = scmp.ne.s32.totalorder %s176, %s177
    %p189 = scmp.eq.s32.totalorder %s20, 1
    %p190 = por %p188, %p189
    %p192 = scmp.ne.s32.totalorder %s177, %s191
    %p193 = scmp.eq.s32.totalorder %s20, 0
    %p194 = por %p192, %p193
    %s195 = ssub.s32 %s14, %s21
    %p196 = scmp.eq.s32.totalorder %s195, 0
    %s198 = sadd.s32 %s197, 1
    %s199 = scalar_select %p196, %s197, %s198
    %p202 = pneg %p196
    %p203 = scmp.eq.s32.totalorder %s14, 1
    %p204 = por %p202, %p203
    %p205 = scmp.ne.s32.totalorder %s197, %s200
    %p206 = scmp.eq.s32.totalorder %s14, 0
    %p207 = por %p205, %p206
    %p208 = scmp.ne.s32.totalorder %s197, %s200
    %p209 = scmp.eq.s32.totalorder %s19, 1
    %p210 = por %p208, %p209
    %p211 = scmp.ne.s32.totalorder %s200, %s201
    %p212 = scmp.eq.s32.totalorder %s19, 0
    %p213 = por %p211, %p212
    %p214 = scmp.ne.s32.totalorder %s200, %s201
    %p215 = scmp.eq.s32.totalorder %s20, 1
    %p216 = por %p214, %p215
    %p218 = scmp.ne.s32.totalorder %s201, %s217
    %p219 = scmp.eq.s32.totalorder %s20, 0
    %p220 = por %p218, %p219
    %p221 = scmp.le.s32.totalorder 1, %s14
    %p222 = scmp.lt.s32.totalorder %s14, 3
    %p223 = pnand %p221, %p222
    %p224 = pneg %p223
    // Predicated region
    $region9: #{block_forward.1} parent=5 // pred_check
      _
    $region10: #{block_forward.1} parent=5 // pred_check_branch
      %226 = sbr.rel (%p223) target = $region12
    $region11: #{block_forward.1} parent=5 // pred_region
      %s227 = ssub.s32 %s14, 1
      // Predicated region
      $region13: #{block_forward.1} parent=11 // pred_check
        %p228 = pneg %p61
      $region14: #{block_forward.1} parent=11 // pred_check_branch
        %230 = sbr.rel (%p228) target = $region16
      $region15: #{block_forward.1} parent=11 // pred_region
        _
      $region16: #{block_forward.1} parent=11 // pred_fallthru
        _
      // Predicated region
      $region17: #{block_forward.1} parent=11 // pred_check
        %p231 = pneg %p82
      $region18: #{block_forward.1} parent=11 // pred_check_branch
        %233 = sbr.rel (%p231) target = $region20
      $region19: #{block_forward.1} parent=11 // pred_region
        _
      $region20: #{block_forward.1} parent=11 // pred_fallthru
        _
      // Predicated region
      $region21: #{block_forward.1} parent=11 // pred_check
        %p234 = pneg %p103
      $region22: #{block_forward.1} parent=11 // pred_check_branch
        %236 = sbr.rel (%p234) target = $region24
      $region23: #{block_forward.1} parent=11 // pred_region
        _
      $region24: #{block_forward.1} parent=11 // pred_fallthru
        _
      // Predicated region
      $region25: #{block_forward.1} parent=11 // pred_check
        %p237 = pneg %p124
      $region26: #{block_forward.1} parent=11 // pred_check_branch
        %239 = sbr.rel (%p237) target = $region28
      $region27: #{block_forward.1} parent=11 // pred_region
        _
      $region28: #{block_forward.1} parent=11 // pred_fallthru
        _
      // Predicated region
      $region29: #{block_forward.1} parent=11 // pred_check
        %p240 = pneg %p145
      $region30: #{block_forward.1} parent=11 // pred_check_branch
        %242 = sbr.rel (%p240) target = $region32
      $region31: #{block_forward.1} parent=11 // pred_region
        _
      $region32: #{block_forward.1} parent=11 // pred_fallthru
        _
      // Predicated region
      $region33: #{block_forward.1} parent=11 // pred_check
        %p243 = pneg %p166
      $region34: #{block_forward.1} parent=11 // pred_check_branch
        %245 = sbr.rel (%p243) target = $region36
      $region35: #{block_forward.1} parent=11 // pred_region
        _
      $region36: #{block_forward.1} parent=11 // pred_fallthru
        _
      // Predicated region
      $region37: #{block_forward.1} parent=11 // pred_check
        %p246 = pneg %p187
      $region38: #{block_forward.1} parent=11 // pred_check_branch
        %248 = sbr.rel (%p246) target = $region40
      $region39: #{block_forward.1} parent=11 // pred_region
        _
      $region40: #{block_forward.1} parent=11 // pred_fallthru
        _
    $region12: #{block_forward.1} parent=5 // pred_fallthru
      _
    %p249 = scmp.lt.s32.totalorder %s14, 2
    // Predicated region
    $region41: #{block_forward.1} parent=5 // pred_check
      %p250 = pneg %p249
    $region42: #{block_forward.1} parent=5 // pred_check_branch
      %252 = sbr.rel (%p250) target = $region44
    $region43: #{block_forward.1} parent=5 // pred_region
      // Predicated region
      $region45: #{block_forward.1} parent=43 // pred_check
        %p253 = pneg %p34
      $region46: #{block_forward.1} parent=43 // pred_check_branch
        %255 = sbr.rel (%p253) target = $region48
      $region47: #{block_forward.1} parent=43 // pred_region
        %p256 = scmp.lt.s32.totalorder %s14, 1
        %s257 = scalar_select %p256, %s14, 1
        %s258 = smul.addr %s257, 11
        %s259 = smul.addr %s258, 8
        %s260 = scalar_lea.vmem %s0, %s259
      $region48: #{block_forward.1} parent=43 // pred_fallthru
        _
    $region44: #{block_forward.1} parent=5 // pred_fallthru
      _
    %p261 = scmp.le.s32.totalorder 1, %s14
    %p262 = scmp.lt.s32.totalorder %s14, 3
    %p263 = pnand %p261, %p262
    %p264 = pneg %p263
    // Predicated region
    $region49: #{block_forward.1} parent=5 // pred_check
      _
    $region50: #{block_forward.1} parent=5 // pred_check_branch
      %266 = sbr.rel (%p263) target = $region52
    $region51: #{block_forward.1} parent=5 // pred_region
      %s267 = ssub.s32 %s14, 1
      %p268 = scmp.lt.s32.totalorder %s19, 1
      %s269 = scalar_select %p268, %s19, 1
      %s270 = smul.addr %s269, 11
      %s271 = smul.addr %s270, 8
      %s272 = scalar_lea.vmem %s0, %s271
      %p273 = pneg %p40
      %p274 = pneg %p37
      %p275 = pneg %p61
      %p276 = pneg %p58
      %p277 = pneg %p82
      %p278 = pneg %p79
      %p279 = pneg %p103
      %p280 = pneg %p100
      %p281 = pneg %p124
      %p282 = pneg %p121
      %p283 = pneg %p145
      %p284 = pneg %p142
      %p285 = pneg %p166
      %p286 = pneg %p163
      %p287 = pneg %p187
      %p288 = pneg %p184
      %p289 = pneg %p213
      %p290 = pneg %p210
      %p291 = scmp.lt.s32.totalorder %s19, 1
      %s292 = scalar_select %p291, %s19, 1
      %s293 = smul.addr %s292, 7
      %s294 = smul.addr %s293, 8
      %s295 = scalar_lea.vmem %s8, %s294
      %p296 = scmp.lt.s32.totalorder %s19, 1
      %s297 = scalar_select %p296, %s19, 1
      %s298 = smul.addr %s297, 11
      %s299 = smul.addr %s298, 8
      %s300 = scalar_lea.vmem %s0, %s299
      %p301 = scmp.lt.s32.totalorder %s19, 1
      %s302 = scalar_select %p301, %s19, 1
      %s303 = smul.addr %s302, 7
      %s304 = smul.addr %s303, 8
      %s305 = scalar_lea.vmem %s8, %s304
      %v307 = vld [vmem:[%s300] sm:$0xff]
      %v308 = vld [vmem:[%s300 + $0x8] sm:$0xff]
      %v309 = vld [vmem:[%s300 + $0x10] sm:$0xff]
      %v310 = vld [vmem:[%s300 + $0x18] sm:$0xff]
      %v311 = vld [vmem:[%s300 + $0x20] sm:$0xff]
      %v312 = vld [vmem:[%s300 + $0x28] sm:$0xff]
      %v313 = vld [vmem:[%s300 + $0x30] sm:$0xff]
      %v314 = vld [vmem:[%s300 + $0x38] sm:$0xff]
      %v315 = vld [vmem:[%s300 + $0x40] sm:$0xff]
      %v316 = vld [vmem:[%s300 + $0x48] sm:$0xff]
      %v317 = vld [vmem:[%s300 + $0x50] sm:$0xff]
      %v318 = vld [vmem:[%s1] sm:$0xff]
      %v319 = vld [vmem:[%s1 + $0x8] sm:$0x1]
      %v320 = vld [vmem:[%s6] sm:$0xff]
      %v321 = vld [vmem:[%s7] sm:$0xff]
      %v322 = vpack.c.bf16 %v308, %v307
      %v323 = vpack.c.bf16 %v310, %v309
      %v324 = vpack.c.bf16 %v312, %v311
      %v325 = vpack.c.bf16 %v314, %v313
      %v326 = vpack.c.bf16 %v316, %v315
      %v327 = vpack.c.bf16 %v317, %v317
      %v333 = vunpack.c.l.b16 %v322
      %v334 = vunpack.c.h.b16 %v322
      %v335 = vunpack.c.l.b16 %v323
      %v336 = vunpack.c.h.b16 %v323
      %v337 = vunpack.c.l.b16 %v324
      %v338 = vunpack.c.h.b16 %v324
      %v339 = vunpack.c.l.b16 %v325
      %v340 = vunpack.c.h.b16 %v325
      %v341 = vunpack.c.l.b16 %v326
      %v342 = vunpack.c.h.b16 %v326
      %v343 = vpack.c.b16 %v333, %v333
      %v344 = vpack.c.b16 %v334, %v334
      %v345 = vpack.c.b16 %v335, %v335
      %v346 = vpack.c.b16 %v336, %v336
      %v347 = vpack.c.b16 %v337, %v337
      %v348 = vpack.c.b16 %v338, %v338
      %v349 = vpack.c.b16 %v339, %v339
      %v350 = vpack.c.b16 %v340, %v340
      %v351 = vpack.c.b16 %v341, %v341
      %v352 = vpack.c.b16 %v342, %v342
      %353 = vrot.lane.b32.xlu0 %v343, 127
      %v354 = vpop.permute.xlu0 %353
      %355 = vrot.lane.b32.xlu0 %v344, 127
      %v356 = vpop.permute.xlu0 %355
      %357 = vrot.lane.b32.xlu0 %v345, 127
      %v358 = vpop.permute.xlu0 %357
      %359 = vrot.lane.b32.xlu0 %v346, 127
      %v360 = vpop.permute.xlu0 %359
      %361 = vrot.lane.b32.xlu0 %v347, 127
      %v362 = vpop.permute.xlu0 %361
      %363 = vrot.lane.b32.xlu0 %v348, 127
      %v364 = vpop.permute.xlu0 %363
      %365 = vrot.lane.b32.xlu0 %v349, 127
      %v366 = vpop.permute.xlu0 %365
      %367 = vrot.lane.b32.xlu0 %v350, 127
      %v368 = vpop.permute.xlu0 %367
      %369 = vrot.lane.b32.xlu0 %v351, 127
      %v370 = vpop.permute.xlu0 %369
      %371 = vrot.lane.b32.xlu0 %v352, 127
      %v372 = vpop.permute.xlu0 %371
      %vm373 = vcmask 1039360
      %v374 = vsel %vm373, %v354, %v356
      %v375 = vsel %vm373, %v356, %v358
      %v376 = vsel %vm373, %v358, %v360
      %v377 = vsel %vm373, %v360, %v362
      %v378 = vsel %vm373, %v362, %v364
      %v379 = vsel %vm373, %v364, %v366
      %v380 = vsel %vm373, %v366, %v368
      %v381 = vsel %vm373, %v368, %v370
      %v382 = vsel %vm373, %v370, %v372
      %383 = vrot.lane.b32.xlu0 %v343, 126
      %v384 = vpop.permute.xlu0 %383
      %385 = vrot.lane.b32.xlu0 %v344, 126
      %v386 = vpop.permute.xlu0 %385
      %387 = vrot.lane.b32.xlu0 %v345, 126
      %v388 = vpop.permute.xlu0 %387
      %389 = vrot.lane.b32.xlu0 %v346, 126
      %v390 = vpop.permute.xlu0 %389
      %391 = vrot.lane.b32.xlu0 %v347, 126
      %v392 = vpop.permute.xlu0 %391
      %393 = vrot.lane.b32.xlu0 %v348, 126
      %v394 = vpop.permute.xlu0 %393
      %395 = vrot.lane.b32.xlu0 %v349, 126
      %v396 = vpop.permute.xlu0 %395
      %397 = vrot.lane.b32.xlu0 %v350, 126
      %v398 = vpop.permute.xlu0 %397
      %399 = vrot.lane.b32.xlu0 %v351, 126
      %v400 = vpop.permute.xlu0 %399
      %401 = vrot.lane.b32.xlu0 %v352, 126
      %v402 = vpop.permute.xlu0 %401
      %vm403 = vcmask 1031168
      %v404 = vsel %vm403, %v384, %v386
      %v405 = vsel %vm403, %v386, %v388
      %v406 = vsel %vm403, %v388, %v390
      %v407 = vsel %vm403, %v390, %v392
      %v408 = vsel %vm403, %v392, %v394
      %v409 = vsel %vm403, %v394, %v396
      %v410 = vsel %vm403, %v396, %v398
      %v411 = vsel %vm403, %v398, %v400
      %v412 = vsel %vm403, %v400, %v402
      %413 = vrot.lane.b32.xlu0 %v343, 111
      %v414 = vpop.permute.xlu0 %413
      %415 = vrot.lane.b32.xlu0 %v344, 111
      %v416 = vpop.permute.xlu0 %415
      %417 = vrot.lane.b32.xlu0 %v345, 111
      %v418 = vpop.permute.xlu0 %417
      %419 = vrot.lane.b32.xlu0 %v346, 111
      %v420 = vpop.permute.xlu0 %419
      %421 = vrot.lane.b32.xlu0 %v347, 111
      %v422 = vpop.permute.xlu0 %421
      %423 = vrot.lane.b32.xlu0 %v348, 111
      %v424 = vpop.permute.xlu0 %423
      %425 = vrot.lane.b32.xlu0 %v349, 111
      %v426 = vpop.permute.xlu0 %425
      %427 = vrot.lane.b32.xlu0 %v350, 111
      %v428 = vpop.permute.xlu0 %427
      %429 = vrot.lane.b32.xlu0 %v351, 111
      %v430 = vpop.permute.xlu0 %429
      %431 = vrot.lane.b32.xlu0 %v352, 111
      %v432 = vpop.permute.xlu0 %431
      %vm433 = vcmask 908288
      %v434 = vsel %vm433, %v414, %v416
      %v435 = vsel %vm433, %v416, %v418
      %v436 = vsel %vm433, %v418, %v420
      %v437 = vsel %vm433, %v420, %v422
      %v438 = vsel %vm433, %v422, %v424
      %v439 = vsel %vm433, %v424, %v426
      %v440 = vsel %vm433, %v426, %v428
      %v441 = vsel %vm433, %v428, %v430
      %v442 = vsel %vm433, %v430, %v432
      %443 = vrot.lane.b32.xlu0 %v344, 110
      %v444 = vpop.permute.xlu0 %443
      %445 = vrot.lane.b32.xlu0 %v345, 110
      %v446 = vpop.permute.xlu0 %445
      %447 = vrot.lane.b32.xlu0 %v346, 110
      %v448 = vpop.permute.xlu0 %447
      %449 = vrot.lane.b32.xlu0 %v347, 110
      %v450 = vpop.permute.xlu0 %449
      %451 = vrot.lane.b32.xlu0 %v348, 110
      %v452 = vpop.permute.xlu0 %451
      %453 = vrot.lane.b32.xlu0 %v349, 110
      %v454 = vpop.permute.xlu0 %453
      %455 = vrot.lane.b32.xlu0 %v350, 110
      %v456 = vpop.permute.xlu0 %455
      %457 = vrot.lane.b32.xlu0 %v351, 110
      %v458 = vpop.permute.xlu0 %457
      %459 = vrot.lane.b32.xlu0 %v352, 110
      %v460 = vpop.permute.xlu0 %459
      %vm461 = vcmask 900096
      %v462 = vsel %vm461, %v444, %v446
      %v463 = vsel %vm461, %v446, %v448
      %v464 = vsel %vm461, %v448, %v450
      %v465 = vsel %vm461, %v450, %v452
      %v466 = vsel %vm461, %v452, %v454
      %v467 = vsel %vm461, %v454, %v456
      %v468 = vsel %vm461, %v456, %v458
      %v469 = vsel %vm461, %v458, %v460
      %v471 = vunpack.c.l.b16 %v327
      %v472 = vpack.c.b16 %v471, %v471
      %473 = vrot.lane.b32.xlu0 %v344, 109
      %v474 = vpop.permute.xlu0 %473
      %475 = vrot.lane.b32.xlu0 %v345, 109
      %v476 = vpop.permute.xlu0 %475
      %477 = vrot.lane.b32.xlu0 %v346, 109
      %v478 = vpop.permute.xlu0 %477
      %479 = vrot.lane.b32.xlu0 %v347, 109
      %v480 = vpop.permute.xlu0 %479
      %481 = vrot.lane.b32.xlu0 %v348, 109
      %v482 = vpop.permute.xlu0 %481
      %483 = vrot.lane.b32.xlu0 %v349, 109
      %v484 = vpop.permute.xlu0 %483
      %485 = vrot.lane.b32.xlu0 %v350, 109
      %v486 = vpop.permute.xlu0 %485
      %487 = vrot.lane.b32.xlu0 %v351, 109
      %v488 = vpop.permute.xlu0 %487
      %489 = vrot.lane.b32.xlu0 %v352, 109
      %v490 = vpop.permute.xlu0 %489
      %491 = vrot.lane.b32.xlu0 %v472, 109
      %v492 = vpop.permute.xlu0 %491
      %vm493 = vcmask 891904
      %v494 = vsel %vm493, %v474, %v476
      %v495 = vsel %vm493, %v476, %v478
      %v496 = vsel %vm493, %v478, %v480
      %v497 = vsel %vm493, %v480, %v482
      %v498 = vsel %vm493, %v482, %v484
      %v499 = vsel %vm493, %v484, %v486
      %v500 = vsel %vm493, %v486, %v488
      %v501 = vsel %vm493, %v488, %v490
      %v502 = vsel %vm493, %v490, %v492
      %503 = vrot.lane.b32.xlu0 %v344, 94
      %v504 = vpop.permute.xlu0 %503
      %505 = vrot.lane.b32.xlu0 %v345, 94
      %v506 = vpop.permute.xlu0 %505
      %507 = vrot.lane.b32.xlu0 %v346, 94
      %v508 = vpop.permute.xlu0 %507
      %509 = vrot.lane.b32.xlu0 %v347, 94
      %v510 = vpop.permute.xlu0 %509
      %511 = vrot.lane.b32.xlu0 %v348, 94
      %v512 = vpop.permute.xlu0 %511
      %513 = vrot.lane.b32.xlu0 %v349, 94
      %v514 = vpop.permute.xlu0 %513
      %515 = vrot.lane.b32.xlu0 %v350, 94
      %v516 = vpop.permute.xlu0 %515
      %517 = vrot.lane.b32.xlu0 %v351, 94
      %v518 = vpop.permute.xlu0 %517
      %519 = vrot.lane.b32.xlu0 %v352, 94
      %v520 = vpop.permute.xlu0 %519
      %521 = vrot.lane.b32.xlu0 %v472, 94
      %v522 = vpop.permute.xlu0 %521
      %vm523 = vcmask 769024
      %v524 = vsel %vm523, %v504, %v506
      %v525 = vsel %vm523, %v506, %v508
      %v526 = vsel %vm523, %v508, %v510
      %v527 = vsel %vm523, %v510, %v512
      %v528 = vsel %vm523, %v512, %v514
      %v529 = vsel %vm523, %v514, %v516
      %v530 = vsel %vm523, %v516, %v518
      %v531 = vsel %vm523, %v518, %v520
      %v532 = vsel %vm523, %v520, %v522
      %533 = vrot.lane.b32.xlu0 %v344, 93
      %v534 = vpop.permute.xlu0 %533
      %535 = vrot.lane.b32.xlu0 %v345, 93
      %v536 = vpop.permute.xlu0 %535
      %537 = vrot.lane.b32.xlu0 %v346, 93
      %v538 = vpop.permute.xlu0 %537
      %539 = vrot.lane.b32.xlu0 %v347, 93
      %v540 = vpop.permute.xlu0 %539
      %541 = vrot.lane.b32.xlu0 %v348, 93
      %v542 = vpop.permute.xlu0 %541
      %543 = vrot.lane.b32.xlu0 %v349, 93
      %v544 = vpop.permute.xlu0 %543
      %545 = vrot.lane.b32.xlu0 %v350, 93
      %v546 = vpop.permute.xlu0 %545
      %547 = vrot.lane.b32.xlu0 %v351, 93
      %v548 = vpop.permute.xlu0 %547
      %549 = vrot.lane.b32.xlu0 %v352, 93
      %v550 = vpop.permute.xlu0 %549
      %551 = vrot.lane.b32.xlu0 %v472, 93
      %v552 = vpop.permute.xlu0 %551
      %vm553 = vcmask 760832
      %v554 = vsel %vm553, %v534, %v536
      %v555 = vsel %vm553, %v536, %v538
      %v556 = vsel %vm553, %v538, %v540
      %v557 = vsel %vm553, %v540, %v542
      %v558 = vsel %vm553, %v542, %v544
      %v559 = vsel %vm553, %v544, %v546
      %v560 = vsel %vm553, %v546, %v548
      %v561 = vsel %vm553, %v548, %v550
      %v562 = vsel %vm553, %v550, %v552
      %563 = vrot.lane.b32.xlu0 %v344, 92
      %v564 = vpop.permute.xlu0 %563
      %565 = vrot.lane.b32.xlu0 %v345, 92
      %v566 = vpop.permute.xlu0 %565
      %567 = vrot.lane.b32.xlu0 %v346, 92
      %v568 = vpop.permute.xlu0 %567
      %569 = vrot.lane.b32.xlu0 %v347, 92
      %v570 = vpop.permute.xlu0 %569
      %571 = vrot.lane.b32.xlu0 %v348, 92
      %v572 = vpop.permute.xlu0 %571
      %573 = vrot.lane.b32.xlu0 %v349, 92
      %v574 = vpop.permute.xlu0 %573
      %575 = vrot.lane.b32.xlu0 %v350, 92
      %v576 = vpop.permute.xlu0 %575
      %577 = vrot.lane.b32.xlu0 %v351, 92
      %v578 = vpop.permute.xlu0 %577
      %579 = vrot.lane.b32.xlu0 %v352, 92
      %v580 = vpop.permute.xlu0 %579
      %581 = vrot.lane.b32.xlu0 %v472, 92
      %v582 = vpop.permute.xlu0 %581
      %vm583 = vcmask 752640
      %v584 = vsel %vm583, %v564, %v566
      %v585 = vsel %vm583, %v566, %v568
      %v586 = vsel %vm583, %v568, %v570
      %v587 = vsel %vm583, %v570, %v572
      %v588 = vsel %vm583, %v572, %v574
      %v589 = vsel %vm583, %v574, %v576
      %v590 = vsel %vm583, %v576, %v578
      %v591 = vsel %vm583, %v578, %v580
      %v592 = vsel %vm583, %v580, %v582
      %vm593 = vcmask 1043456
      %v596 = vsel %vm593, %v343, %v374
      %v599 = vsel %vm593, %v344, %v375
      %v602 = vsel %vm593, %v345, %v376
      %v605 = vsel %vm593, %v346, %v377
      %v608 = vsel %vm593, %v347, %v378
      %v611 = vsel %vm593, %v348, %v379
      %v614 = vsel %vm593, %v349, %v380
      %v617 = vsel %vm593, %v350, %v381
      %v620 = vsel %vm593, %v351, %v382
      %v623 = vsel %vm593, %v352, %v372
      %v626 = vsel %vm593, %v404, %v434
      %v629 = vsel %vm593, %v405, %v435
      %v632 = vsel %vm593, %v406, %v436
      %v635 = vsel %vm593, %v407, %v437
      %v638 = vsel %vm593, %v408, %v438
      %v641 = vsel %vm593, %v409, %v439
      %v644 = vsel %vm593, %v410, %v440
      %v647 = vsel %vm593, %v411, %v441
      %v650 = vsel %vm593, %v412, %v442
      %v653 = vsel %vm593, %v402, %v432
      %v656 = vsel %vm593, %v444, %v474
      %v659 = vsel %vm593, %v462, %v494
      %v662 = vsel %vm593, %v463, %v495
      %v665 = vsel %vm593, %v464, %v496
      %v668 = vsel %vm593, %v465, %v497
      %v671 = vsel %vm593, %v466, %v498
      %v674 = vsel %vm593, %v467, %v499
      %v677 = vsel %vm593, %v468, %v500
      %v680 = vsel %vm593, %v469, %v501
      %v683 = vsel %vm593, %v460, %v502
      %v686 = vsel %vm593, %v504, %v534
      %v689 = vsel %vm593, %v524, %v554
      %v692 = vsel %vm593, %v525, %v555
      %v695 = vsel %vm593, %v526, %v556
      %v698 = vsel %vm593, %v527, %v557
      %v701 = vsel %vm593, %v528, %v558
      %v704 = vsel %vm593, %v529, %v559
      %v707 = vsel %vm593, %v530, %v560
      %v710 = vsel %vm593, %v531, %v561
      %v713 = vsel %vm593, %v532, %v562
      %v714 = vld [vmem:[%s2] sm:$0xf]
      %755 = vrot.lane.b32.xlu0 %v596, 18
      %v756 = vpop.permute.xlu0 %755
      %757 = vrot.lane.b32.xlu0 %v599, 18
      %v758 = vpop.permute.xlu0 %757
      %759 = vrot.lane.b32.xlu0 %v602, 18
      %v760 = vpop.permute.xlu0 %759
      %761 = vrot.lane.b32.xlu0 %v605, 18
      %v762 = vpop.permute.xlu0 %761
      %763 = vrot.lane.b32.xlu0 %v608, 18
      %v764 = vpop.permute.xlu0 %763
      %765 = vrot.lane.b32.xlu0 %v611, 18
      %v766 = vpop.permute.xlu0 %765
      %767 = vrot.lane.b32.xlu0 %v614, 18
      %v768 = vpop.permute.xlu0 %767
      %769 = vrot.lane.b32.xlu0 %v617, 18
      %v770 = vpop.permute.xlu0 %769
      %771 = vrot.lane.b32.xlu0 %v620, 18
      %v772 = vpop.permute.xlu0 %771
      %773 = vrot.lane.b32.xlu0 %v623, 18
      %v774 = vpop.permute.xlu0 %773
      %775 = vrot.lane.b32.xlu0 %v626, 18
      %v776 = vpop.permute.xlu0 %775
      %777 = vrot.lane.b32.xlu0 %v629, 18
      %v778 = vpop.permute.xlu0 %777
      %779 = vrot.lane.b32.xlu0 %v632, 18
      %v780 = vpop.permute.xlu0 %779
      %781 = vrot.lane.b32.xlu0 %v635, 18
      %v782 = vpop.permute.xlu0 %781
      %783 = vrot.lane.b32.xlu0 %v638, 18
      %v784 = vpop.permute.xlu0 %783
      %785 = vrot.lane.b32.xlu0 %v641, 18
      %v786 = vpop.permute.xlu0 %785
      %787 = vrot.lane.b32.xlu0 %v644, 18
      %v788 = vpop.permute.xlu0 %787
      %789 = vrot.lane.b32.xlu0 %v647, 18
      %v790 = vpop.permute.xlu0 %789
      %791 = vrot.lane.b32.xlu0 %v650, 18
      %v792 = vpop.permute.xlu0 %791
      %793 = vrot.lane.b32.xlu0 %v653, 18
      %v794 = vpop.permute.xlu0 %793
      %795 = vrot.lane.b32.xlu0 %v656, 18
      %v796 = vpop.permute.xlu0 %795
      %797 = vrot.lane.b32.xlu0 %v659, 18
      %v798 = vpop.permute.xlu0 %797
      %799 = vrot.lane.b32.xlu0 %v662, 18
      %v800 = vpop.permute.xlu0 %799
      %801 = vrot.lane.b32.xlu0 %v665, 18
      %v802 = vpop.permute.xlu0 %801
      %803 = vrot.lane.b32.xlu0 %v668, 18
      %v804 = vpop.permute.xlu0 %803
      %805 = vrot.lane.b32.xlu0 %v671, 18
      %v806 = vpop.permute.xlu0 %805
      %807 = vrot.lane.b32.xlu0 %v674, 18
      %v808 = vpop.permute.xlu0 %807
      %809 = vrot.lane.b32.xlu0 %v677, 18
      %v810 = vpop.permute.xlu0 %809
      %811 = vrot.lane.b32.xlu0 %v680, 18
      %v812 = vpop.permute.xlu0 %811
      %813 = vrot.lane.b32.xlu0 %v683, 18
      %v814 = vpop.permute.xlu0 %813
      %815 = vrot.lane.b32.xlu0 %v686, 18
      %v816 = vpop.permute.xlu0 %815
      %817 = vrot.lane.b32.xlu0 %v689, 18
      %v818 = vpop.permute.xlu0 %817
      %819 = vrot.lane.b32.xlu0 %v692, 18
      %v820 = vpop.permute.xlu0 %819
      %821 = vrot.lane.b32.xlu0 %v695, 18
      %v822 = vpop.permute.xlu0 %821
      %823 = vrot.lane.b32.xlu0 %v698, 18
      %v824 = vpop.permute.xlu0 %823
      %825 = vrot.lane.b32.xlu0 %v701, 18
      %v826 = vpop.permute.xlu0 %825
      %827 = vrot.lane.b32.xlu0 %v704, 18
      %v828 = vpop.permute.xlu0 %827
      %829 = vrot.lane.b32.xlu0 %v707, 18
      %v830 = vpop.permute.xlu0 %829
      %831 = vrot.lane.b32.xlu0 %v710, 18
      %v832 = vpop.permute.xlu0 %831
      %833 = vrot.lane.b32.xlu0 %v713, 18
      %v834 = vpop.permute.xlu0 %833
      %835 = vrot.lane.b32.xlu0 %v564, 18
      %v836 = vpop.permute.xlu0 %835
      %837 = vrot.lane.b32.xlu0 %v584, 18
      %v838 = vpop.permute.xlu0 %837
      %839 = vrot.lane.b32.xlu0 %v585, 18
      %v840 = vpop.permute.xlu0 %839
      %841 = vrot.lane.b32.xlu0 %v586, 18
      %v842 = vpop.permute.xlu0 %841
      %843 = vrot.lane.b32.xlu0 %v587, 18
      %v844 = vpop.permute.xlu0 %843
      %845 = vrot.lane.b32.xlu0 %v588, 18
      %v846 = vpop.permute.xlu0 %845
      %847 = vrot.lane.b32.xlu0 %v589, 18
      %v848 = vpop.permute.xlu0 %847
      %849 = vrot.lane.b32.xlu0 %v590, 18
      %v850 = vpop.permute.xlu0 %849
      %851 = vrot.lane.b32.xlu0 %v591, 18
      %v852 = vpop.permute.xlu0 %851
      %853 = vrot.lane.b32.xlu0 %v592, 18
      %v854 = vpop.permute.xlu0 %853
      %vm855 = vcmask 146432
      %v856 = vsel %vm855, %v756, %v758
      %v857 = vsel %vm855, %v758, %v760
      %v858 = vsel %vm855, %v760, %v762
      %v859 = vsel %vm855, %v762, %v764
      %v860 = vsel %vm855, %v764, %v766
      %v861 = vsel %vm855, %v766, %v768
      %v862 = vsel %vm855, %v768, %v770
      %v863 = vsel %vm855, %v770, %v772
      %v864 = vsel %vm855, %v772, %v774
      %v865 = vsel %vm855, %v776, %v778
      %v866 = vsel %vm855, %v778, %v780
      %v867 = vsel %vm855, %v780, %v782
      %v868 = vsel %vm855, %v782, %v784
      %v869 = vsel %vm855, %v784, %v786
      %v870 = vsel %vm855, %v786, %v788
      %v871 = vsel %vm855, %v788, %v790
      %v872 = vsel %vm855, %v790, %v792
      %v873 = vsel %vm855, %v792, %v794
      %v874 = vsel %vm855, %v796, %v798
      %v875 = vsel %vm855, %v798, %v800
      %v876 = vsel %vm855, %v800, %v802
      %v877 = vsel %vm855, %v802, %v804
      %v878 = vsel %vm855, %v804, %v806
      %v879 = vsel %vm855, %v806, %v808
      %v880 = vsel %vm855, %v808, %v810
      %v881 = vsel %vm855, %v810, %v812
      %v882 = vsel %vm855, %v812, %v814
      %v883 = vsel %vm855, %v816, %v818
      %v884 = vsel %vm855, %v818, %v820
      %v885 = vsel %vm855, %v820, %v822
      %v886 = vsel %vm855, %v822, %v824
      %v887 = vsel %vm855, %v824, %v826
      %v888 = vsel %vm855, %v826, %v828
      %v889 = vsel %vm855, %v828, %v830
      %v890 = vsel %vm855, %v830, %v832
      %v891 = vsel %vm855, %v832, %v834
      %v892 = vsel %vm855, %v836, %v838
      %v893 = vsel %vm855, %v838, %v840
      %v894 = vsel %vm855, %v840, %v842
      %v895 = vsel %vm855, %v842, %v844
      %v896 = vsel %vm855, %v844, %v846
      %v897 = vsel %vm855, %v846, %v848
      %v898 = vsel %vm855, %v848, %v850
      %v899 = vsel %vm855, %v850, %v852
      %v900 = vsel %vm855, %v852, %v854
      %vm937 = vcmask 588800
      %v939 = vsel %vm937, %v714, 0
      %v942 = vsel %vm593, %v892, 0
      %v945 = vsel %vm593, %v893, 0
      %v948 = vsel %vm593, %v894, 0
      %v951 = vsel %vm593, %v895, 0
      %v954 = vsel %vm593, %v896, 0
      %v957 = vsel %vm593, %v897, 0
      %v960 = vsel %vm593, %v898, 0
      %v963 = vsel %vm593, %v899, 0
      %v966 = vsel %vm593, %v900, 0
      %968 = vmatpush.bf16.msra.mxu0 0
      %969 = vmatpush.bf16.msra.mxu0 0
      %970 = vmatpush.bf16.msra.mxu0 0
      %971 = vmatpush.bf16.msra.mxu0 %v942
      %972 = vmatpush.bf16.msra.mxu0 %v883
      %973 = vmatpush.bf16.msra.mxu0 %v874
      %974 = vmatpush.bf16.msra.mxu0 %v865
      %975 = vmatpush.bf16.msra.mxu0 %v856
      %976 = vmatmul.bf16.gmra.mxu0 %v939
      %v977 = vpop.f32.mrf.mxu0
      %v978 = vadd.f32 0.0, %v977
      %v979 = vpop.f32.mrf.mxu0
      %980 = vdwg.mxu0
      %981 = vmatpush.bf16.msra.mxu0 0
      %982 = vmatpush.bf16.msra.mxu0 0
      %983 = vmatpush.bf16.msra.mxu0 0
      %984 = vmatpush.bf16.msra.mxu0 %v945
      %985 = vmatpush.bf16.msra.mxu0 %v884
      %986 = vmatpush.bf16.msra.mxu0 %v875
      %987 = vmatpush.bf16.msra.mxu0 %v866
      %988 = vmatpush.bf16.msra.mxu0 %v857
      %989 = vmatmul.bf16.gmra.mxu0 %v939
      %v990 = vpop.f32.mrf.mxu0
      %v991 = vadd.f32 0.0, %v990
      %v992 = vpop.f32.mrf.mxu0
      %993 = vdwg.mxu0
      %994 = vmatpush.bf16.msra.mxu0 0
      %995 = vmatpush.bf16.msra.mxu0 0
      %996 = vmatpush.bf16.msra.mxu0 0
      %997 = vmatpush.bf16.msra.mxu0 %v948
      %998 = vmatpush.bf16.msra.mxu0 %v885
      %999 = vmatpush.bf16.msra.mxu0 %v876
      %1000 = vmatpush.bf16.msra.mxu0 %v867
      %1001 = vmatpush.bf16.msra.mxu0 %v858
      %1002 = vmatmul.bf16.gmra.mxu0 %v939
      %v1003 = vpop.f32.mrf.mxu0
      %v1004 = vadd.f32 0.0, %v1003
      %v1005 = vpop.f32.mrf.mxu0
      %1006 = vdwg.mxu0
      %1007 = vmatpush.bf16.msra.mxu0 0
      %1008 = vmatpush.bf16.msra.mxu0 0
      %1009 = vmatpush.bf16.msra.mxu0 0
      %1010 = vmatpush.bf16.msra.mxu0 %v951
      %1011 = vmatpush.bf16.msra.mxu0 %v886
      %1012 = vmatpush.bf16.msra.mxu0 %v877
      %1013 = vmatpush.bf16.msra.mxu0 %v868
      %1014 = vmatpush.bf16.msra.mxu0 %v859
      %1015 = vmatmul.bf16.gmra.mxu0 %v939
      %v1016 = vpop.f32.mrf.mxu0
      %v1017 = vadd.f32 0.0, %v1016
      %v1018 = vpop.f32.mrf.mxu0
      %1019 = vdwg.mxu0
      %1020 = vmatpush.bf16.msra.mxu0 0
      %1021 = vmatpush.bf16.msra.mxu0 0
      %1022 = vmatpush.bf16.msra.mxu0 0
      %1023 = vmatpush.bf16.msra.mxu0 %v954
      %1024 = vmatpush.bf16.msra.mxu0 %v887
      %1025 = vmatpush.bf16.msra.mxu0 %v878
      %1026 = vmatpush.bf16.msra.mxu0 %v869
      %1027 = vmatpush.bf16.msra.mxu0 %v860
      %1028 = vmatmul.bf16.gmra.mxu0 %v939
      %v1029 = vpop.f32.mrf.mxu0
      %v1030 = vadd.f32 0.0, %v1029
      %v1031 = vpop.f32.mrf.mxu0
      %1032 = vdwg.mxu0
      %1033 = vmatpush.bf16.msra.mxu0 0
      %1034 = vmatpush.bf16.msra.mxu0 0
      %1035 = vmatpush.bf16.msra.mxu0 0
      %1036 = vmatpush.bf16.msra.mxu0 %v957
      %1037 = vmatpush.bf16.msra.mxu0 %v888
      %1038 = vmatpush.bf16.msra.mxu0 %v879
      %1039 = vmatpush.bf16.msra.mxu0 %v870
      %1040 = vmatpush.bf16.msra.mxu0 %v861
      %1041 = vmatmul.bf16.gmra.mxu0 %v939
      %v1042 = vpop.f32.mrf.mxu0
      %v1043 = vadd.f32 0.0, %v1042
      %v1044 = vpop.f32.mrf.mxu0
      %1045 = vdwg.mxu0
      %1046 = vmatpush.bf16.msra.mxu0 0
      %1047 = vmatpush.bf16.msra.mxu0 0
      %1048 = vmatpush.bf16.msra.mxu0 0
      %1049 = vmatpush.bf16.msra.mxu0 %v960
      %1050 = vmatpush.bf16.msra.mxu0 %v889
      %1051 = vmatpush.bf16.msra.mxu0 %v880
      %1052 = vmatpush.bf16.msra.mxu0 %v871
      %1053 = vmatpush.bf16.msra.mxu0 %v862
      %1054 = vmatmul.bf16.gmra.mxu0 %v939
      %v1055 = vpop.f32.mrf.mxu0
      %v1056 = vadd.f32 0.0, %v1055
      %v1057 = vpop.f32.mrf.mxu0
      %1058 = vdwg.mxu0
      %1059 = vmatpush.bf16.msra.mxu0 0
      %1060 = vmatpush.bf16.msra.mxu0 0
      %1061 = vmatpush.bf16.msra.mxu0 0
      %1062 = vmatpush.bf16.msra.mxu0 %v963
      %1063 = vmatpush.bf16.msra.mxu0 %v890
      %1064 = vmatpush.bf16.msra.mxu0 %v881
      %1065 = vmatpush.bf16.msra.mxu0 %v872
      %1066 = vmatpush.bf16.msra.mxu0 %v863
      %1067 = vmatmul.bf16.gmra.mxu0 %v939
      %v1068 = vpop.f32.mrf.mxu0
      %v1069 = vadd.f32 0.0, %v1068
      %v1070 = vpop.f32.mrf.mxu0
      %1071 = vdwg.mxu0
      %1072 = vmatpush.bf16.msra.mxu0 0
      %1073 = vmatpush.bf16.msra.mxu0 0
      %1074 = vmatpush.bf16.msra.mxu0 0
      %1075 = vmatpush.bf16.msra.mxu0 %v966
      %1076 = vmatpush.bf16.msra.mxu0 %v891
      %1077 = vmatpush.bf16.msra.mxu0 %v882
      %1078 = vmatpush.bf16.msra.mxu0 %v873
      %1079 = vmatpush.bf16.msra.mxu0 %v864
      %1080 = vmatmul.bf16.gmra.mxu0 %v939
      %v1081 = vpop.f32.mrf.mxu0
      %v1082 = vadd.f32 0.0, %v1081
      %v1083 = vpop.f32.mrf.mxu0
      %1084 = vdwg.mxu0
      %1086 = vset.pattern.permute.xlu0 0
      %1087 = vperm.xlu0 %1086, %v320
      %v1088 = vpop.permute.xlu0 %1087
      %v1090 = vmul.f32 %v978, %v1088
      %v1091 = vmul.f32 %v991, %v1088
      %v1092 = vmul.f32 %v1004, %v1088
      %v1093 = vmul.f32 %v1017, %v1088
      %v1094 = vmul.f32 %v1030, %v1088
      %v1095 = vmul.f32 %v1043, %v1088
      %v1096 = vmul.f32 %v1056, %v1088
      %v1097 = vmul.f32 %v1069, %v1088
      %v1098 = vmul.f32 %v1082, %v1088
      %1100 = vset.pattern.permute.xlu0 0
      %1101 = vperm.xlu0 %1100, %v321
      %v1102 = vpop.permute.xlu0 %1101
      %v1104 = vadd.f32 %v1090, %v1102
      %v1105 = vadd.f32 %v1091, %v1102
      %v1106 = vadd.f32 %v1092, %v1102
      %v1107 = vadd.f32 %v1093, %v1102
      %v1108 = vadd.f32 %v1094, %v1102
      %v1109 = vadd.f32 %v1095, %v1102
      %v1110 = vadd.f32 %v1096, %v1102
      %v1111 = vadd.f32 %v1097, %v1102
      %v1112 = vadd.f32 %v1098, %v1102
      %v1113 = vmax.f32 %v1104, 0.0
      %v1114 = vmax.f32 %v1105, 0.0
      %v1115 = vmax.f32 %v1106, 0.0
      %v1116 = vmax.f32 %v1107, 0.0
      %v1117 = vmax.f32 %v1108, 0.0
      %v1118 = vmax.f32 %v1109, 0.0
      %v1119 = vmax.f32 %v1110, 0.0
      %v1120 = vmax.f32 %v1111, 0.0
      %v1121 = vmax.f32 %v1112, 0.0
      %v1124 = vperm.slane %v318, 0
      %v1125 = vperm.slane %v318, 1
      %v1126 = vperm.slane %v318, 2
      %v1127 = vperm.slane %v318, 3
      %v1128 = vperm.slane %v318, 4
      %v1129 = vperm.slane %v318, 5
      %v1130 = vperm.slane %v318, 6
      %v1131 = vperm.slane %v318, 7
      %v1132 = vperm.slane %v319, 0
      %v1142 = vmul.f32 %v1113, %v1124
      %v1143 = vmul.f32 %v1114, %v1125
      %v1144 = vmul.f32 %v1115, %v1126
      %v1145 = vmul.f32 %v1116, %v1127
      %v1146 = vmul.f32 %v1117, %v1128
      %v1147 = vmul.f32 %v1118, %v1129
      %v1148 = vmul.f32 %v1119, %v1130
      %v1149 = vmul.f32 %v1120, %v1131
      %v1150 = vmul.f32 %v1121, %v1132
      %v1151 = vpack.c.bf16 %v1143, %v1142
      %v1152 = vpack.c.bf16 %v1145, %v1144
      %v1153 = vpack.c.bf16 %v1147, %v1146
      %v1154 = vpack.c.bf16 %v1149, %v1148
      %v1155 = vpack.c.bf16 %v1150, %v1150
      %v1160 = vunpack.c.l.b16 %v1151
      %v1161 = vunpack.c.h.b16 %v1151
      %v1162 = vunpack.c.l.b16 %v1152
      %v1163 = vunpack.c.h.b16 %v1152
      %v1164 = vunpack.c.l.b16 %v1153
      %v1165 = vunpack.c.h.b16 %v1153
      %v1166 = vunpack.c.l.b16 %v1154
      %v1167 = vunpack.c.h.b16 %v1154
      %v1168 = vpack.c.b16 %v1160, %v1160
      %v1169 = vpack.c.b16 %v1161, %v1161
      %v1170 = vpack.c.b16 %v1162, %v1162
      %v1171 = vpack.c.b16 %v1163, %v1163
      %v1172 = vpack.c.b16 %v1164, %v1164
      %v1173 = vpack.c.b16 %v1165, %v1165
      %v1174 = vpack.c.b16 %v1166, %v1166
      %v1175 = vpack.c.b16 %v1167, %v1167
      %1176 = vrot.lane.b32.xlu0 %v1168, 127
      %v1177 = vpop.permute.xlu0 %1176
      %1178 = vrot.lane.b32.xlu0 %v1169, 127
      %v1179 = vpop.permute.xlu0 %1178
      %1180 = vrot.lane.b32.xlu0 %v1170, 127
      %v1181 = vpop.permute.xlu0 %1180
      %1182 = vrot.lane.b32.xlu0 %v1171, 127
      %v1183 = vpop.permute.xlu0 %1182
      %1184 = vrot.lane.b32.xlu0 %v1172, 127
      %v1185 = vpop.permute.xlu0 %1184
      %1186 = vrot.lane.b32.xlu0 %v1173, 127
      %v1187 = vpop.permute.xlu0 %1186
      %1188 = vrot.lane.b32.xlu0 %v1174, 127
      %v1189 = vpop.permute.xlu0 %1188
      %1190 = vrot.lane.b32.xlu0 %v1175, 127
      %v1191 = vpop.permute.xlu0 %1190
      %v1192 = vsel %vm373, %v1177, %v1179
      %v1193 = vsel %vm373, %v1179, %v1181
      %v1194 = vsel %vm373, %v1181, %v1183
      %v1195 = vsel %vm373, %v1183, %v1185
      %v1196 = vsel %vm373, %v1185, %v1187
      %v1197 = vsel %vm373, %v1187, %v1189
      %v1198 = vsel %vm373, %v1189, %v1191
      %1199 = vrot.lane.b32.xlu0 %v1168, 126
      %v1200 = vpop.permute.xlu0 %1199
      %1201 = vrot.lane.b32.xlu0 %v1169, 126
      %v1202 = vpop.permute.xlu0 %1201
      %1203 = vrot.lane.b32.xlu0 %v1170, 126
      %v1204 = vpop.permute.xlu0 %1203
      %1205 = vrot.lane.b32.xlu0 %v1171, 126
      %v1206 = vpop.permute.xlu0 %1205
      %1207 = vrot.lane.b32.xlu0 %v1172, 126
      %v1208 = vpop.permute.xlu0 %1207
      %1209 = vrot.lane.b32.xlu0 %v1173, 126
      %v1210 = vpop.permute.xlu0 %1209
      %1211 = vrot.lane.b32.xlu0 %v1174, 126
      %v1212 = vpop.permute.xlu0 %1211
      %1213 = vrot.lane.b32.xlu0 %v1175, 126
      %v1214 = vpop.permute.xlu0 %1213
      %v1215 = vsel %vm403, %v1200, %v1202
      %v1216 = vsel %vm403, %v1202, %v1204
      %v1217 = vsel %vm403, %v1204, %v1206
      %v1218 = vsel %vm403, %v1206, %v1208
      %v1219 = vsel %vm403, %v1208, %v1210
      %v1220 = vsel %vm403, %v1210, %v1212
      %v1221 = vsel %vm403, %v1212, %v1214
      %1222 = vrot.lane.b32.xlu0 %v1168, 111
      %v1223 = vpop.permute.xlu0 %1222
      %1224 = vrot.lane.b32.xlu0 %v1169, 111
      %v1225 = vpop.permute.xlu0 %1224
      %1226 = vrot.lane.b32.xlu0 %v1170, 111
      %v1227 = vpop.permute.xlu0 %1226
      %1228 = vrot.lane.b32.xlu0 %v1171, 111
      %v1229 = vpop.permute.xlu0 %1228
      %1230 = vrot.lane.b32.xlu0 %v1172, 111
      %v1231 = vpop.permute.xlu0 %1230
      %1232 = vrot.lane.b32.xlu0 %v1173, 111
      %v1233 = vpop.permute.xlu0 %1232
      %1234 = vrot.lane.b32.xlu0 %v1174, 111
      %v1235 = vpop.permute.xlu0 %1234
      %1236 = vrot.lane.b32.xlu0 %v1175, 111
      %v1237 = vpop.permute.xlu0 %1236
      %v1238 = vsel %vm433, %v1223, %v1225
      %v1239 = vsel %vm433, %v1225, %v1227
      %v1240 = vsel %vm433, %v1227, %v1229
      %v1241 = vsel %vm433, %v1229, %v1231
      %v1242 = vsel %vm433, %v1231, %v1233
      %v1243 = vsel %vm433, %v1233, %v1235
      %v1244 = vsel %vm433, %v1235, %v1237
      %1245 = vrot.lane.b32.xlu0 %v1169, 110
      %v1246 = vpop.permute.xlu0 %1245
      %1247 = vrot.lane.b32.xlu0 %v1170, 110
      %v1248 = vpop.permute.xlu0 %1247
      %1249 = vrot.lane.b32.xlu0 %v1171, 110
      %v1250 = vpop.permute.xlu0 %1249
      %1251 = vrot.lane.b32.xlu0 %v1172, 110
      %v1252 = vpop.permute.xlu0 %1251
      %1253 = vrot.lane.b32.xlu0 %v1173, 110
      %v1254 = vpop.permute.xlu0 %1253
      %1255 = vrot.lane.b32.xlu0 %v1174, 110
      %v1256 = vpop.permute.xlu0 %1255
      %1257 = vrot.lane.b32.xlu0 %v1175, 110
      %v1258 = vpop.permute.xlu0 %1257
      %v1259 = vsel %vm461, %v1246, %v1248
      %v1260 = vsel %vm461, %v1248, %v1250
      %v1261 = vsel %vm461, %v1250, %v1252
      %v1262 = vsel %vm461, %v1252, %v1254
      %v1263 = vsel %vm461, %v1254, %v1256
      %v1264 = vsel %vm461, %v1256, %v1258
      %v1266 = vunpack.c.l.b16 %v1155
      %v1267 = vpack.c.b16 %v1266, %v1266
      %1268 = vrot.lane.b32.xlu0 %v1169, 109
      %v1269 = vpop.permute.xlu0 %1268
      %1270 = vrot.lane.b32.xlu0 %v1170, 109
      %v1271 = vpop.permute.xlu0 %1270
      %1272 = vrot.lane.b32.xlu0 %v1171, 109
      %v1273 = vpop.permute.xlu0 %1272
      %1274 = vrot.lane.b32.xlu0 %v1172, 109
      %v1275 = vpop.permute.xlu0 %1274
      %1276 = vrot.lane.b32.xlu0 %v1173, 109
      %v1277 = vpop.permute.xlu0 %1276
      %1278 = vrot.lane.b32.xlu0 %v1174, 109
      %v1279 = vpop.permute.xlu0 %1278
      %1280 = vrot.lane.b32.xlu0 %v1175, 109
      %v1281 = vpop.permute.xlu0 %1280
      %1282 = vrot.lane.b32.xlu0 %v1267, 109
      %v1283 = vpop.permute.xlu0 %1282
      %v1284 = vsel %vm493, %v1269, %v1271
      %v1285 = vsel %vm493, %v1271, %v1273
      %v1286 = vsel %vm493, %v1273, %v1275
      %v1287 = vsel %vm493, %v1275, %v1277
      %v1288 = vsel %vm493, %v1277, %v1279
      %v1289 = vsel %vm493, %v1279, %v1281
      %v1290 = vsel %vm493, %v1281, %v1283
      %1291 = vrot.lane.b32.xlu0 %v1169, 94
      %v1292 = vpop.permute.xlu0 %1291
      %1293 = vrot.lane.b32.xlu0 %v1170, 94
      %v1294 = vpop.permute.xlu0 %1293
      %1295 = vrot.lane.b32.xlu0 %v1171, 94
      %v1296 = vpop.permute.xlu0 %1295
      %1297 = vrot.lane.b32.xlu0 %v1172, 94
      %v1298 = vpop.permute.xlu0 %1297
      %1299 = vrot.lane.b32.xlu0 %v1173, 94
      %v1300 = vpop.permute.xlu0 %1299
      %1301 = vrot.lane.b32.xlu0 %v1174, 94
      %v1302 = vpop.permute.xlu0 %1301
      %1303 = vrot.lane.b32.xlu0 %v1175, 94
      %v1304 = vpop.permute.xlu0 %1303
      %1305 = vrot.lane.b32.xlu0 %v1267, 94
      %v1306 = vpop.permute.xlu0 %1305
      %v1307 = vsel %vm523, %v1292, %v1294
      %v1308 = vsel %vm523, %v1294, %v1296
      %v1309 = vsel %vm523, %v1296, %v1298
      %v1310 = vsel %vm523, %v1298, %v1300
      %v1311 = vsel %vm523, %v1300, %v1302
      %v1312 = vsel %vm523, %v1302, %v1304
      %v1313 = vsel %vm523, %v1304, %v1306
      %1314 = vrot.lane.b32.xlu0 %v1169, 93
      %v1315 = vpop.permute.xlu0 %1314
      %1316 = vrot.lane.b32.xlu0 %v1170, 93
      %v1317 = vpop.permute.xlu0 %1316
      %1318 = vrot.lane.b32.xlu0 %v1171, 93
      %v1319 = vpop.permute.xlu0 %1318
      %1320 = vrot.lane.b32.xlu0 %v1172, 93
      %v1321 = vpop.permute.xlu0 %1320
      %1322 = vrot.lane.b32.xlu0 %v1173, 93
      %v1323 = vpop.permute.xlu0 %1322
      %1324 = vrot.lane.b32.xlu0 %v1174, 93
      %v1325 = vpop.permute.xlu0 %1324
      %1326 = vrot.lane.b32.xlu0 %v1175, 93
      %v1327 = vpop.permute.xlu0 %1326
      %1328 = vrot.lane.b32.xlu0 %v1267, 93
      %v1329 = vpop.permute.xlu0 %1328
      %v1330 = vsel %vm553, %v1315, %v1317
      %v1331 = vsel %vm553, %v1317, %v1319
      %v1332 = vsel %vm553, %v1319, %v1321
      %v1333 = vsel %vm553, %v1321, %v1323
      %v1334 = vsel %vm553, %v1323, %v1325
      %v1335 = vsel %vm553, %v1325, %v1327
      %v1336 = vsel %vm553, %v1327, %v1329
      %1337 = vrot.lane.b32.xlu0 %v1169, 92
      %v1338 = vpop.permute.xlu0 %1337
      %1339 = vrot.lane.b32.xlu0 %v1170, 92
      %v1340 = vpop.permute.xlu0 %1339
      %1341 = vrot.lane.b32.xlu0 %v1171, 92
      %v1342 = vpop.permute.xlu0 %1341
      %1343 = vrot.lane.b32.xlu0 %v1172, 92
      %v1344 = vpop.permute.xlu0 %1343
      %1345 = vrot.lane.b32.xlu0 %v1173, 92
      %v1346 = vpop.permute.xlu0 %1345
      %1347 = vrot.lane.b32.xlu0 %v1174, 92
      %v1348 = vpop.permute.xlu0 %1347
      %1349 = vrot.lane.b32.xlu0 %v1175, 92
      %v1350 = vpop.permute.xlu0 %1349
      %1351 = vrot.lane.b32.xlu0 %v1267, 92
      %v1352 = vpop.permute.xlu0 %1351
      %v1353 = vsel %vm583, %v1338, %v1340
      %v1354 = vsel %vm583, %v1340, %v1342
      %v1355 = vsel %vm583, %v1342, %v1344
      %v1356 = vsel %vm583, %v1344, %v1346
      %v1357 = vsel %vm583, %v1346, %v1348
      %v1358 = vsel %vm583, %v1348, %v1350
      %v1359 = vsel %vm583, %v1350, %v1352
      %v1362 = vsel %vm593, %v1168, %v1192
      %v1365 = vsel %vm593, %v1169, %v1193
      %v1368 = vsel %vm593, %v1170, %v1194
      %v1371 = vsel %vm593, %v1171, %v1195
      %v1374 = vsel %vm593, %v1172, %v1196
      %v1377 = vsel %vm593, %v1173, %v1197
      %v1380 = vsel %vm593, %v1174, %v1198
      %v1383 = vsel %vm593, %v1175, %v1191
      %v1386 = vsel %vm593, %v1215, %v1238
      %v1389 = vsel %vm593, %v1216, %v1239
      %v1392 = vsel %vm593, %v1217, %v1240
      %v1395 = vsel %vm593, %v1218, %v1241
      %v1398 = vsel %vm593, %v1219, %v1242
      %v1401 = vsel %vm593, %v1220, %v1243
      %v1404 = vsel %vm593, %v1221, %v1244
      %v1407 = vsel %vm593, %v1214, %v1237
      %v1410 = vsel %vm593, %v1246, %v1269
      %v1413 = vsel %vm593, %v1259, %v1284
      %v1416 = vsel %vm593, %v1260, %v1285
      %v1419 = vsel %vm593, %v1261, %v1286
      %v1422 = vsel %vm593, %v1262, %v1287
      %v1425 = vsel %vm593, %v1263, %v1288
      %v1428 = vsel %vm593, %v1264, %v1289
      %v1431 = vsel %vm593, %v1258, %v1290
      %v1434 = vsel %vm593, %v1292, %v1315
      %v1437 = vsel %vm593, %v1307, %v1330
      %v1440 = vsel %vm593, %v1308, %v1331
      %v1443 = vsel %vm593, %v1309, %v1332
      %v1446 = vsel %vm593, %v1310, %v1333
      %v1449 = vsel %vm593, %v1311, %v1334
      %v1452 = vsel %vm593, %v1312, %v1335
      %v1455 = vsel %vm593, %v1313, %v1336
      %v1456 = vld [vmem:[%s3] sm:$0xf]
      %1489 = vrot.lane.b32.xlu0 %v1362, 18
      %v1490 = vpop.permute.xlu0 %1489
      %1491 = vrot.lane.b32.xlu0 %v1365, 18
      %v1492 = vpop.permute.xlu0 %1491
      %1493 = vrot.lane.b32.xlu0 %v1368, 18
      %v1494 = vpop.permute.xlu0 %1493
      %1495 = vrot.lane.b32.xlu0 %v1371, 18
      %v1496 = vpop.permute.xlu0 %1495
      %1497 = vrot.lane.b32.xlu0 %v1374, 18
      %v1498 = vpop.permute.xlu0 %1497
      %1499 = vrot.lane.b32.xlu0 %v1377, 18
      %v1500 = vpop.permute.xlu0 %1499
      %1501 = vrot.lane.b32.xlu0 %v1380, 18
      %v1502 = vpop.permute.xlu0 %1501
      %1503 = vrot.lane.b32.xlu0 %v1383, 18
      %v1504 = vpop.permute.xlu0 %1503
      %1505 = vrot.lane.b32.xlu0 %v1386, 18
      %v1506 = vpop.permute.xlu0 %1505
      %1507 = vrot.lane.b32.xlu0 %v1389, 18
      %v1508 = vpop.permute.xlu0 %1507
      %1509 = vrot.lane.b32.xlu0 %v1392, 18
      %v1510 = vpop.permute.xlu0 %1509
      %1511 = vrot.lane.b32.xlu0 %v1395, 18
      %v1512 = vpop.permute.xlu0 %1511
      %1513 = vrot.lane.b32.xlu0 %v1398, 18
      %v1514 = vpop.permute.xlu0 %1513
      %1515 = vrot.lane.b32.xlu0 %v1401, 18
      %v1516 = vpop.permute.xlu0 %1515
      %1517 = vrot.lane.b32.xlu0 %v1404, 18
      %v1518 = vpop.permute.xlu0 %1517
      %1519 = vrot.lane.b32.xlu0 %v1407, 18
      %v1520 = vpop.permute.xlu0 %1519
      %1521 = vrot.lane.b32.xlu0 %v1410, 18
      %v1522 = vpop.permute.xlu0 %1521
      %1523 = vrot.lane.b32.xlu0 %v1413, 18
      %v1524 = vpop.permute.xlu0 %1523
      %1525 = vrot.lane.b32.xlu0 %v1416, 18
      %v1526 = vpop.permute.xlu0 %1525
      %1527 = vrot.lane.b32.xlu0 %v1419, 18
      %v1528 = vpop.permute.xlu0 %1527
      %1529 = vrot.lane.b32.xlu0 %v1422, 18
      %v1530 = vpop.permute.xlu0 %1529
      %1531 = vrot.lane.b32.xlu0 %v1425, 18
      %v1532 = vpop.permute.xlu0 %1531
      %1533 = vrot.lane.b32.xlu0 %v1428, 18
      %v1534 = vpop.permute.xlu0 %1533
      %1535 = vrot.lane.b32.xlu0 %v1431, 18
      %v1536 = vpop.permute.xlu0 %1535
      %1537 = vrot.lane.b32.xlu0 %v1434, 18
      %v1538 = vpop.permute.xlu0 %1537
      %1539 = vrot.lane.b32.xlu0 %v1437, 18
      %v1540 = vpop.permute.xlu0 %1539
      %1541 = vrot.lane.b32.xlu0 %v1440, 18
      %v1542 = vpop.permute.xlu0 %1541
      %1543 = vrot.lane.b32.xlu0 %v1443, 18
      %v1544 = vpop.permute.xlu0 %1543
      %1545 = vrot.lane.b32.xlu0 %v1446, 18
      %v1546 = vpop.permute.xlu0 %1545
      %1547 = vrot.lane.b32.xlu0 %v1449, 18
      %v1548 = vpop.permute.xlu0 %1547
      %1549 = vrot.lane.b32.xlu0 %v1452, 18
      %v1550 = vpop.permute.xlu0 %1549
      %1551 = vrot.lane.b32.xlu0 %v1455, 18
      %v1552 = vpop.permute.xlu0 %1551
      %1553 = vrot.lane.b32.xlu0 %v1338, 18
      %v1554 = vpop.permute.xlu0 %1553
      %1555 = vrot.lane.b32.xlu0 %v1353, 18
      %v1556 = vpop.permute.xlu0 %1555
      %1557 = vrot.lane.b32.xlu0 %v1354, 18
      %v1558 = vpop.permute.xlu0 %1557
      %1559 = vrot.lane.b32.xlu0 %v1355, 18
      %v1560 = vpop.permute.xlu0 %1559
      %1561 = vrot.lane.b32.xlu0 %v1356, 18
      %v1562 = vpop.permute.xlu0 %1561
      %1563 = vrot.lane.b32.xlu0 %v1357, 18
      %v1564 = vpop.permute.xlu0 %1563
      %1565 = vrot.lane.b32.xlu0 %v1358, 18
      %v1566 = vpop.permute.xlu0 %1565
      %1567 = vrot.lane.b32.xlu0 %v1359, 18
      %v1568 = vpop.permute.xlu0 %1567
      %v1569 = vsel %vm855, %v1490, %v1492
      %v1570 = vsel %vm855, %v1492, %v1494
      %v1571 = vsel %vm855, %v1494, %v1496
      %v1572 = vsel %vm855, %v1496, %v1498
      %v1573 = vsel %vm855, %v1498, %v1500
      %v1574 = vsel %vm855, %v1500, %v1502
      %v1575 = vsel %vm855, %v1502, %v1504
      %v1576 = vsel %vm855, %v1506, %v1508
      %v1577 = vsel %vm855, %v1508, %v1510
      %v1578 = vsel %vm855, %v1510, %v1512
      %v1579 = vsel %vm855, %v1512, %v1514
      %v1580 = vsel %vm855, %v1514, %v1516
      %v1581 = vsel %vm855, %v1516, %v1518
      %v1582 = vsel %vm855, %v1518, %v1520
      %v1583 = vsel %vm855, %v1522, %v1524
      %v1584 = vsel %vm855, %v1524, %v1526
      %v1585 = vsel %vm855, %v1526, %v1528
      %v1586 = vsel %vm855, %v1528, %v1530
      %v1587 = vsel %vm855, %v1530, %v1532
      %v1588 = vsel %vm855, %v1532, %v1534
      %v1589 = vsel %vm855, %v1534, %v1536
      %v1590 = vsel %vm855, %v1538, %v1540
      %v1591 = vsel %vm855, %v1540, %v1542
      %v1592 = vsel %vm855, %v1542, %v1544
      %v1593 = vsel %vm855, %v1544, %v1546
      %v1594 = vsel %vm855, %v1546, %v1548
      %v1595 = vsel %vm855, %v1548, %v1550
      %v1596 = vsel %vm855, %v1550, %v1552
      %v1597 = vsel %vm855, %v1554, %v1556
      %v1598 = vsel %vm855, %v1556, %v1558
      %v1599 = vsel %vm855, %v1558, %v1560
      %v1600 = vsel %vm855, %v1560, %v1562
      %v1601 = vsel %vm855, %v1562, %v1564
      %v1602 = vsel %vm855, %v1564, %v1566
      %v1603 = vsel %vm855, %v1566, %v1568
      %v1633 = vsel %vm937, %v1456, 0
      %v1636 = vsel %vm593, %v1597, 0
      %v1639 = vsel %vm593, %v1598, 0
      %v1642 = vsel %vm593, %v1599, 0
      %v1645 = vsel %vm593, %v1600, 0
      %v1648 = vsel %vm593, %v1601, 0
      %v1651 = vsel %vm593, %v1602, 0
      %v1654 = vsel %vm593, %v1603, 0
      %1656 = vmatpush.bf16.msra.mxu0 0
      %1657 = vmatpush.bf16.msra.mxu0 0
      %1658 = vmatpush.bf16.msra.mxu0 0
      %1659 = vmatpush.bf16.msra.mxu0 %v1636
      %1660 = vmatpush.bf16.msra.mxu0 %v1590
      %1661 = vmatpush.bf16.msra.mxu0 %v1583
      %1662 = vmatpush.bf16.msra.mxu0 %v1576
      %1663 = vmatpush.bf16.msra.mxu0 %v1569
      %1664 = vmatmul.bf16.gmra.mxu0 %v1633
      %v1665 = vpop.f32.mrf.mxu0
      %v1666 = vadd.f32 0.0, %v1665
      %v1667 = vpop.f32.mrf.mxu0
      %1668 = vdwg.mxu0
      %1669 = vmatpush.bf16.msra.mxu0 0
      %1670 = vmatpush.bf16.msra.mxu0 0
      %1671 = vmatpush.bf16.msra.mxu0 0
      %1672 = vmatpush.bf16.msra.mxu0 %v1639
      %1673 = vmatpush.bf16.msra.mxu0 %v1591
      %1674 = vmatpush.bf16.msra.mxu0 %v1584
      %1675 = vmatpush.bf16.msra.mxu0 %v1577
      %1676 = vmatpush.bf16.msra.mxu0 %v1570
      %1677 = vmatmul.bf16.gmra.mxu0 %v1633
      %v1678 = vpop.f32.mrf.mxu0
      %v1679 = vadd.f32 0.0, %v1678
      %v1680 = vpop.f32.mrf.mxu0
      %1681 = vdwg.mxu0
      %1682 = vmatpush.bf16.msra.mxu0 0
      %1683 = vmatpush.bf16.msra.mxu0 0
      %1684 = vmatpush.bf16.msra.mxu0 0
      %1685 = vmatpush.bf16.msra.mxu0 %v1642
      %1686 = vmatpush.bf16.msra.mxu0 %v1592
      %1687 = vmatpush.bf16.msra.mxu0 %v1585
      %1688 = vmatpush.bf16.msra.mxu0 %v1578
      %1689 = vmatpush.bf16.msra.mxu0 %v1571
      %1690 = vmatmul.bf16.gmra.mxu0 %v1633
      %v1691 = vpop.f32.mrf.mxu0
      %v1692 = vadd.f32 0.0, %v1691
      %v1693 = vpop.f32.mrf.mxu0
      %1694 = vdwg.mxu0
      %1695 = vmatpush.bf16.msra.mxu0 0
      %1696 = vmatpush.bf16.msra.mxu0 0
      %1697 = vmatpush.bf16.msra.mxu0 0
      %1698 = vmatpush.bf16.msra.mxu0 %v1645
      %1699 = vmatpush.bf16.msra.mxu0 %v1593
      %1700 = vmatpush.bf16.msra.mxu0 %v1586
      %1701 = vmatpush.bf16.msra.mxu0 %v1579
      %1702 = vmatpush.bf16.msra.mxu0 %v1572
      %1703 = vmatmul.bf16.gmra.mxu0 %v1633
      %v1704 = vpop.f32.mrf.mxu0
      %v1705 = vadd.f32 0.0, %v1704
      %v1706 = vpop.f32.mrf.mxu0
      %1707 = vdwg.mxu0
      %1708 = vmatpush.bf16.msra.mxu0 0
      %1709 = vmatpush.bf16.msra.mxu0 0
      %1710 = vmatpush.bf16.msra.mxu0 0
      %1711 = vmatpush.bf16.msra.mxu0 %v1648
      %1712 = vmatpush.bf16.msra.mxu0 %v1594
      %1713 = vmatpush.bf16.msra.mxu0 %v1587
      %1714 = vmatpush.bf16.msra.mxu0 %v1580
      %1715 = vmatpush.bf16.msra.mxu0 %v1573
      %1716 = vmatmul.bf16.gmra.mxu0 %v1633
      %v1717 = vpop.f32.mrf.mxu0
      %v1718 = vadd.f32 0.0, %v1717
      %v1719 = vpop.f32.mrf.mxu0
      %1720 = vdwg.mxu0
      %1721 = vmatpush.bf16.msra.mxu0 0
      %1722 = vmatpush.bf16.msra.mxu0 0
      %1723 = vmatpush.bf16.msra.mxu0 0
      %1724 = vmatpush.bf16.msra.mxu0 %v1651
      %1725 = vmatpush.bf16.msra.mxu0 %v1595
      %1726 = vmatpush.bf16.msra.mxu0 %v1588
      %1727 = vmatpush.bf16.msra.mxu0 %v1581
      %1728 = vmatpush.bf16.msra.mxu0 %v1574
      %1729 = vmatmul.bf16.gmra.mxu0 %v1633
      %v1730 = vpop.f32.mrf.mxu0
      %v1731 = vadd.f32 0.0, %v1730
      %v1732 = vpop.f32.mrf.mxu0
      %1733 = vdwg.mxu0
      %1734 = vmatpush.bf16.msra.mxu0 0
      %1735 = vmatpush.bf16.msra.mxu0 0
      %1736 = vmatpush.bf16.msra.mxu0 0
      %1737 = vmatpush.bf16.msra.mxu0 %v1654
      %1738 = vmatpush.bf16.msra.mxu0 %v1596
      %1739 = vmatpush.bf16.msra.mxu0 %v1589
      %1740 = vmatpush.bf16.msra.mxu0 %v1582
      %1741 = vmatpush.bf16.msra.mxu0 %v1575
      %1742 = vmatmul.bf16.gmra.mxu0 %v1633
      %v1743 = vpop.f32.mrf.mxu0
      %v1744 = vadd.f32 0.0, %v1743
      %v1745 = vpop.f32.mrf.mxu0
      %1746 = vdwg.mxu0
      %v1747 = vmul.f32 %v1666, %v1088
      %v1748 = vmul.f32 %v1679, %v1088
      %v1749 = vmul.f32 %v1692, %v1088
      %v1750 = vmul.f32 %v1705, %v1088
      %v1751 = vmul.f32 %v1718, %v1088
      %v1752 = vmul.f32 %v1731, %v1088
      %v1753 = vmul.f32 %v1744, %v1088
      %v1754 = vadd.f32 %v1747, %v1102
      %v1755 = vadd.f32 %v1748, %v1102
      %v1756 = vadd.f32 %v1749, %v1102
      %v1757 = vadd.f32 %v1750, %v1102
      %v1758 = vadd.f32 %v1751, %v1102
      %v1759 = vadd.f32 %v1752, %v1102
      %v1760 = vadd.f32 %v1753, %v1102
      %v1761 = vld [vmem:[%s4] sm:$0xf]
      %v1762 = vpack.c.bf16 %v309, %v309
      %v1763 = vpack.c.bf16 %v310, %v310
      %v1764 = vpack.c.bf16 %v311, %v311
      %v1765 = vpack.c.bf16 %v312, %v312
      %v1766 = vpack.c.bf16 %v313, %v313
      %v1767 = vpack.c.bf16 %v314, %v314
      %v1768 = vpack.c.bf16 %v315, %v315
      %v1769 = vld [vmem:[%s5] sm:$0xff]
      %1771 = vset.pattern.permute.xlu0 0
      %1772 = vperm.xlu0 %1771, %v1769
      %v1773 = vpop.permute.xlu0 %1772
      %vm1775 = vcmask 64512
      %v1777 = vsel %vm1775, %v1761, 0
      %v1780 = vsel %vm593, %v1762, 0
      %v1783 = vsel %vm593, %v1763, 0
      %v1786 = vsel %vm593, %v1764, 0
      %v1789 = vsel %vm593, %v1765, 0
      %v1792 = vsel %vm593, %v1766, 0
      %v1795 = vsel %vm593, %v1767, 0
      %v1798 = vsel %vm593, %v1768, 0
      %1800 = vmatpush.bf16.msra.mxu0 0
      %1801 = vmatpush.bf16.msra.mxu0 0
      %1802 = vmatpush.bf16.msra.mxu0 0
      %1803 = vmatpush.bf16.msra.mxu0 0
      %1804 = vmatpush.bf16.msra.mxu0 0
      %1805 = vmatpush.bf16.msra.mxu0 0
      %1806 = vmatpush.bf16.msra.mxu0 0
      %1807 = vmatpush.bf16.msra.mxu0 %v1780
      %1808 = vmatmul.bf16.gmra.mxu0 %v1777
      %v1809 = vpop.f32.mrf.mxu0
      %v1810 = vadd.f32 %v1773, %v1809
      %v1811 = vpop.f32.mrf.mxu0
      %1812 = vdwg.mxu0
      %1813 = vmatpush.bf16.msra.mxu0 0
      %1814 = vmatpush.bf16.msra.mxu0 0
      %1815 = vmatpush.bf16.msra.mxu0 0
      %1816 = vmatpush.bf16.msra.mxu0 0
      %1817 = vmatpush.bf16.msra.mxu0 0
      %1818 = vmatpush.bf16.msra.mxu0 0
      %1819 = vmatpush.bf16.msra.mxu0 0
      %1820 = vmatpush.bf16.msra.mxu0 %v1783
      %1821 = vmatmul.bf16.gmra.mxu0 %v1777
      %v1822 = vpop.f32.mrf.mxu0
      %v1823 = vadd.f32 %v1773, %v1822
      %v1824 = vpop.f32.mrf.mxu0
      %1825 = vdwg.mxu0
      %1826 = vmatpush.bf16.msra.mxu0 0
      %1827 = vmatpush.bf16.msra.mxu0 0
      %1828 = vmatpush.bf16.msra.mxu0 0
      %1829 = vmatpush.bf16.msra.mxu0 0
      %1830 = vmatpush.bf16.msra.mxu0 0
      %1831 = vmatpush.bf16.msra.mxu0 0
      %1832 = vmatpush.bf16.msra.mxu0 0
      %1833 = vmatpush.bf16.msra.mxu0 %v1786
      %1834 = vmatmul.bf16.gmra.mxu0 %v1777
      %v1835 = vpop.f32.mrf.mxu0
      %v1836 = vadd.f32 %v1773, %v1835
      %v1837 = vpop.f32.mrf.mxu0
      %1838 = vdwg.mxu0
      %1839 = vmatpush.bf16.msra.mxu0 0
      %1840 = vmatpush.bf16.msra.mxu0 0
      %1841 = vmatpush.bf16.msra.mxu0 0
      %1842 = vmatpush.bf16.msra.mxu0 0
      %1843 = vmatpush.bf16.msra.mxu0 0
      %1844 = vmatpush.bf16.msra.mxu0 0
      %1845 = vmatpush.bf16.msra.mxu0 0
      %1846 = vmatpush.bf16.msra.mxu0 %v1789
      %1847 = vmatmul.bf16.gmra.mxu0 %v1777
      %v1848 = vpop.f32.mrf.mxu0
      %v1849 = vadd.f32 %v1773, %v1848
      %v1850 = vpop.f32.mrf.mxu0
      %1851 = vdwg.mxu0
      %1852 = vmatpush.bf16.msra.mxu0 0
      %1853 = vmatpush.bf16.msra.mxu0 0
      %1854 = vmatpush.bf16.msra.mxu0 0
      %1855 = vmatpush.bf16.msra.mxu0 0
      %1856 = vmatpush.bf16.msra.mxu0 0
      %1857 = vmatpush.bf16.msra.mxu0 0
      %1858 = vmatpush.bf16.msra.mxu0 0
      %1859 = vmatpush.bf16.msra.mxu0 %v1792
      %1860 = vmatmul.bf16.gmra.mxu0 %v1777
      %v1861 = vpop.f32.mrf.mxu0
      %v1862 = vadd.f32 %v1773, %v1861
      %v1863 = vpop.f32.mrf.mxu0
      %1864 = vdwg.mxu0
      %1865 = vmatpush.bf16.msra.mxu0 0
      %1866 = vmatpush.bf16.msra.mxu0 0
      %1867 = vmatpush.bf16.msra.mxu0 0
      %1868 = vmatpush.bf16.msra.mxu0 0
      %1869 = vmatpush.bf16.msra.mxu0 0
      %1870 = vmatpush.bf16.msra.mxu0 0
      %1871 = vmatpush.bf16.msra.mxu0 0
      %1872 = vmatpush.bf16.msra.mxu0 %v1795
      %1873 = vmatmul.bf16.gmra.mxu0 %v1777
      %v1874 = vpop.f32.mrf.mxu0
      %v1875 = vadd.f32 %v1773, %v1874
      %v1876 = vpop.f32.mrf.mxu0
      %1877 = vdwg.mxu0
      %1878 = vmatpush.bf16.msra.mxu0 0
      %1879 = vmatpush.bf16.msra.mxu0 0
      %1880 = vmatpush.bf16.msra.mxu0 0
      %1881 = vmatpush.bf16.msra.mxu0 0
      %1882 = vmatpush.bf16.msra.mxu0 0
      %1883 = vmatpush.bf16.msra.mxu0 0
      %1884 = vmatpush.bf16.msra.mxu0 0
      %1885 = vmatpush.bf16.msra.mxu0 %v1798
      %1886 = vmatmul.bf16.gmra.mxu0 %v1777
      %v1887 = vpop.f32.mrf.mxu0
      %v1888 = vadd.f32 %v1773, %v1887
      %v1889 = vpop.f32.mrf.mxu0
      %1890 = vdwg.mxu0
      %v1891 = vadd.f32 %v1754, %v1810
      %v1892 = vadd.f32 %v1755, %v1823
      %v1893 = vadd.f32 %v1756, %v1836
      %v1894 = vadd.f32 %v1757, %v1849
      %v1895 = vadd.f32 %v1758, %v1862
      %v1896 = vadd.f32 %v1759, %v1875
      %v1897 = vadd.f32 %v1760, %v1888
      %1898 = vst [vmem:[%s305] sm:$0xff] %v1891
      %1899 = vst [vmem:[%s305 + $0x8] sm:$0xff] %v1892
      %1900 = vst [vmem:[%s305 + $0x10] sm:$0xff] %v1893
      %1901 = vst [vmem:[%s305 + $0x18] sm:$0xff] %v1894
      %1902 = vst [vmem:[%s305 + $0x20] sm:$0xff] %v1895
      %1903 = vst [vmem:[%s305 + $0x28] sm:$0xff] %v1896
      %1904 = vst [vmem:[%s305 + $0x30] sm:$0xff] %v1897
      %p1905 = scmp.lt.s32.totalorder %s19, 1
      %s1906 = scalar_select %p1905, %s19, 1
      %s1907 = smul.addr %s1906, 7
      %s1908 = smul.addr %s1907, 8
      %s1909 = scalar_lea.vmem %s8, %s1908
      // Predicated region
      $region53: #{block_forward.1} parent=51 // pred_check
        %p1910 = pneg %p210
      $region54: #{block_forward.1} parent=51 // pred_check_branch
        %1912 = sbr.rel (%p1910) target = $region56
      $region55: #{block_forward.1} parent=51 // pred_region
        _
      $region56: #{block_forward.1} parent=51 // pred_fallthru
        _
    $region52: #{block_forward.1} parent=5 // pred_fallthru
      _
    %p1913 = scmp.le.s32.totalorder 2, %s14
    // Predicated region
    $region57: #{block_forward.1} parent=5 // pred_check
      %p1914 = pneg %p1913
    $region58: #{block_forward.1} parent=5 // pred_check_branch
      %1916 = sbr.rel (%p1914) target = $region60
    $region59: #{block_forward.1} parent=5 // pred_region
      %s1917 = ssub.s32 %s14, 2
      // Predicated region
      $region61: #{block_forward.1} parent=59 // pred_check
        %p1918 = pneg %p216
      $region62: #{block_forward.1} parent=59 // pred_check_branch
        %1920 = sbr.rel (%p1918) target = $region64
      $region63: #{block_forward.1} parent=59 // pred_region
        %p1921 = scmp.lt.s32.totalorder %s20, 1
        %s1922 = scalar_select %p1921, %s20, 1
        %s1923 = smul.addr %s1922, 7
        %s1924 = smul.addr %s1923, 8
        %s1925 = scalar_lea.vmem %s8, %s1924
      $region64: #{block_forward.1} parent=59 // pred_fallthru
        _
    $region60: #{block_forward.1} parent=5 // pred_fallthru
      _
  $region6: #{block_forward.1} parent=0 // loop_footer
    %s18 = sadd.s32 1, %s14
  $region7: #{block_forward.1} parent=0 // loop_footer_branch
    %13 = sbr.rel target = $region3
  $region8: #{block_forward.1} parent=0 // loop_exit
    _

</llo_original>
